<compile_context>
chip_gen: v6e
topology: v6e:2x2x1
jax: 0.10.0
libtpu: 0.0.40
codegen_flags: <defaults>
</compile_context>

<pallas_src>
from functools import partial

import jax
import jax.numpy as jnp
from jax.experimental import pallas as pl
from jax.experimental.pallas import tpu as pltpu


def _fused_kernel(x_ref, w_ref, b_ref, o_ref):
    # x_ref: (Cin, tile_p)   w_ref: (Cout, Cin)   b_ref: (Cout, 1)
    # o_ref: (Cout, tile_p)
    x = x_ref[...]
    w = w_ref[...]
    cin = x.shape[0]
    # K = 3 contraction as broadcast FMAs on the VPU (MXU would be ~2% utilized
    # and needs a padded relayout of the (Cout, 3) weight tile).
    acc = b_ref[...] + w[:, 0:1] * x[0:1, :]
    for c in range(1, cin):
        acc = acc + w[:, c:c + 1] * x[c:c + 1, :]
    o_ref[...] = acc.astype(o_ref.dtype)


@partial(jax.jit, static_argnames=("num_p_tiles", "core_parallel"))
def model_forward(x_nchw, w1, b1, w2, b2, *, num_p_tiles=1, core_parallel=False):
    N, Cin, H, W = x_nchw.shape
    Cout = w1.shape[1]
    P = H * W
    assert P % num_p_tiles == 0, "H*W must be divisible by num_p_tiles"
    tile_p = P // num_p_tiles
    assert tile_p % 128 == 0, "pixel tile must be lane-aligned (multiple of 128)"
    # VMEM footprint per step (double-buffered): ~2*(Cin+Cout)*tile_p*4 B.
    # At tile_p=4096 that is ~1.1 MiB - far under the 32 MiB scoped default on
    # every generation (including v7x's 64 MiB physical VMEM).

    # ---- fold the whole graph into one affine map (fused under jit) ----
    w2mI = w2 - jnp.eye(Cout, dtype=w2.dtype)
    w_eff = w1 @ w2mI                                                   # (Cin, Cout)
    b_eff = b1 @ w2mI + b2 - 5.0 * jnp.sum(w2, axis=0, keepdims=True) + 15.0

    # ---- channel-major views: all reshapes below are free (no transpose) ----
    x_cm = x_nchw.reshape(N, Cin, P)   # (N, Cin, P)
    wT = w_eff.T                       # (Cout, Cin)
    b_col = b_eff.T                    # (Cout, 1)

    p_sem = pltpu.CORE_PARALLEL if core_parallel else pltpu.ARBITRARY

    out = pl.pallas_call(
        _fused_kernel,
        out_shape=jax.ShapeDtypeStruct((N, Cout, P), jnp.float32),
        grid_spec=pltpu.PrefetchScalarGridSpec(
            num_scalar_prefetch=0,
            grid=(N, num_p_tiles),
            in_specs=[
                # leading size-1 batch dim squeezed out of the kernel ref
                pl.BlockSpec((None, Cin, tile_p), lambda n, p: (n, 0, p)),
                pl.BlockSpec((Cout, Cin), lambda n, p: (0, 0)),
                pl.BlockSpec((Cout, 1), lambda n, p: (0, 0)),
            ],
            out_specs=pl.BlockSpec((None, Cout, tile_p), lambda n, p: (n, 0, p)),
        ),
        compiler_params=pltpu.CompilerParams(
            dimension_semantics=(pltpu.ARBITRARY, p_sem)),
        cost_estimate=pl.CostEstimate(
            flops=2 * N * Cin * Cout * P,
            transcendentals=0,
            bytes_accessed=(N * Cin * P + N * Cout * P + Cout * Cin + Cout) * 4),
    )(x_cm, wT, b_col)

    # (N, Cout, P) is byte-identical to the NCHW output; reshape is free.
    return out.reshape(N, Cout, H, W)


def _pick_config():
    """Choose pixel tiling / core semantics from the local TPU generation."""
    kind = ""
    try:
        kind = jax.devices()[0].device_kind.lower()
    except Exception:
        pass
    if ("v7" in kind) or ("tpu7" in kind):
        # 2 TensorCores per chip: split the pixel axis across cores explicitly.
        return 2, True
    # v5e / v6e: single TensorCore -> one grid step (no benefit from splitting).
    return 1, False


def _reference(x_nchw, w1, b1, w2, b2):
    """Pure-JAX reference of the UNFUSED graph (validates the algebraic fusion)."""
    N, Cin, H, W = x_nchw.shape
    x_p = jnp.transpose(x_nchw, (0, 2, 3, 1)).reshape(-1, Cin)
    v1 = x_p @ w1 + b1
    v2 = v1 - 15.0
    v6 = (v1 - 5.0) @ w2 + b2
    v7 = v6 - v2
    return jnp.transpose(v7.reshape(N, H, W, -1), (0, 3, 1, 2))


if __name__ == "__main__":
    key = jax.random.PRNGKey(0)
    kx, kw1, kb1, kw2, kb2 = jax.random.split(key, 5)

    N, Cin, H, W = 1, 3, 64, 64
    Cout = 32

    # Deterministic parameter init (Conv2d-style uniform bound = 1/sqrt(fan_in)).
    bound1 = 1.0 / (Cin ** 0.5)
    w1 = jax.random.uniform(kw1, (Cin, Cout), jnp.float32, -bound1, bound1)
    b1 = jax.random.uniform(kb1, (1, Cout), jnp.float32, -bound1, bound1)
    bound2 = 1.0 / (Cout ** 0.5)
    w2 = jax.random.uniform(kw2, (Cout, Cout), jnp.float32, -bound2, bound2)
    b2 = jax.random.uniform(kb2, (1, Cout), jnp.float32, -bound2, bound2)

    x1 = jax.random.normal(kx, (N, Cin, H, W), jnp.float32)

    num_p_tiles, core_parallel = _pick_config()
    v7 = model_forward(x1, w1, b1, w2, b2,
                       num_p_tiles=num_p_tiles, core_parallel=core_parallel)
    v7 = jax.block_until_ready(v7)

    ref = _reference(x1, w1, b1, w2, b2)
    assert v7.shape == (N, Cout, H, W), v7.shape
    assert jnp.allclose(v7, ref, atol=1e-4, rtol=1e-4), "mismatch vs reference"

    print("KERNEL_OK")
</pallas_src>

<mosaic_0001>
module attributes {stable_mosaic.version = 11 : i64} {
  func.func @_fused_kernel(%arg0: i32, %arg1: i32, %arg2: memref<1x3x4096xf32, #tpu.memory_space<vmem>>, %arg3: memref<32x3xf32, #tpu.memory_space<vmem>>, %arg4: memref<32x1xf32, #tpu.memory_space<vmem>>, %arg5: memref<1x32x4096xf32, #tpu.memory_space<vmem>>) attributes {dimension_semantics = [#tpu.dimension_semantics<arbitrary>, #tpu.dimension_semantics<arbitrary>], iteration_bounds = array<i64: 1, 1>, scalar_prefetch = 0 : i64, scratch_operands = 0 : i64, tpu.core_type = #tpu.core_type<tc>, window_params = [{transform_indices = @transform_0, window_bounds = array<i64: 1, 3, 4096>}, {pipeline_mode = #tpu.pipeline_mode<synchronous>, transform_indices = @transform_1, window_bounds = array<i64: 32, 3>}, {pipeline_mode = #tpu.pipeline_mode<synchronous>, transform_indices = @transform_2, window_bounds = array<i64: 32, 1>}, {transform_indices = @transform_3, window_bounds = array<i64: 1, 32, 4096>}]} {
    %c0 = arith.constant 0 : index
    %c0_0 = arith.constant 0 : index
    %c0_1 = arith.constant 0 : index
    %0 = vector.load %arg2[%c0, %c0_0, %c0_1] : memref<1x3x4096xf32, #tpu.memory_space<vmem>>, vector<1x3x4096xf32>
    %1 = vector.shape_cast %0 : vector<1x3x4096xf32> to vector<3x4096xf32>
    %c0_2 = arith.constant 0 : index
    %c0_3 = arith.constant 0 : index
    %2 = vector.load %arg3[%c0_2, %c0_3] : memref<32x3xf32, #tpu.memory_space<vmem>>, vector<32x3xf32>
    %c0_4 = arith.constant 0 : index
    %c0_5 = arith.constant 0 : index
    %3 = vector.load %arg4[%c0_4, %c0_5] : memref<32x1xf32, #tpu.memory_space<vmem>>, vector<32x1xf32>
    %4 = vector.extract_strided_slice %2 {offsets = [0, 0], sizes = [32, 1], strides = [1, 1]} : vector<32x3xf32> to vector<32x1xf32>
    %5 = vector.extract_strided_slice %1 {offsets = [0, 0], sizes = [1, 4096], strides = [1, 1]} : vector<3x4096xf32> to vector<1x4096xf32>
    %6 = vector.broadcast %4 : vector<32x1xf32> to vector<32x4096xf32>
    %7 = vector.broadcast %5 : vector<1x4096xf32> to vector<32x4096xf32>
    %8 = arith.mulf %6, %7 : vector<32x4096xf32>
    %9 = vector.broadcast %3 : vector<32x1xf32> to vector<32x4096xf32>
    %10 = arith.addf %9, %8 : vector<32x4096xf32>
    %11 = vector.extract_strided_slice %2 {offsets = [0, 1], sizes = [32, 1], strides = [1, 1]} : vector<32x3xf32> to vector<32x1xf32>
    %12 = vector.extract_strided_slice %1 {offsets = [1, 0], sizes = [1, 4096], strides = [1, 1]} : vector<3x4096xf32> to vector<1x4096xf32>
    %13 = vector.broadcast %11 : vector<32x1xf32> to vector<32x4096xf32>
    %14 = vector.broadcast %12 : vector<1x4096xf32> to vector<32x4096xf32>
    %15 = arith.mulf %13, %14 : vector<32x4096xf32>
    %16 = arith.addf %10, %15 : vector<32x4096xf32>
    %17 = vector.extract_strided_slice %2 {offsets = [0, 2], sizes = [32, 1], strides = [1, 1]} : vector<32x3xf32> to vector<32x1xf32>
    %18 = vector.extract_strided_slice %1 {offsets = [2, 0], sizes = [1, 4096], strides = [1, 1]} : vector<3x4096xf32> to vector<1x4096xf32>
    %19 = vector.broadcast %17 : vector<32x1xf32> to vector<32x4096xf32>
    %20 = vector.broadcast %18 : vector<1x4096xf32> to vector<32x4096xf32>
    %21 = arith.mulf %19, %20 : vector<32x4096xf32>
    %22 = arith.addf %16, %21 : vector<32x4096xf32>
    %c0_6 = arith.constant 0 : index
    %c0_7 = arith.constant 0 : index
    %c0_8 = arith.constant 0 : index
    %23 = vector.load %arg5[%c0_6, %c0_7, %c0_8] : memref<1x32x4096xf32, #tpu.memory_space<vmem>>, vector<1x32x4096xf32>
    %24 = vector.shape_cast %23 : vector<1x32x4096xf32> to vector<32x4096xf32>
    %25 = vector.shape_cast %22 : vector<32x4096xf32> to vector<1x32x4096xf32>
    tpu.vector_store %arg5[%c0_6, %c0_7, %c0_8], %25 {strides = array<i32>} : memref<1x32x4096xf32, #tpu.memory_space<vmem>>, vector<1x32x4096xf32>,
    return
  }
  func.func @transform_0(%arg0: i32, %arg1: i32) -> (i32, i32, i32) {
    %c0_i32 = arith.constant 0 : i32
    %c0_i32_0 = arith.constant 0 : i32
    return %arg0, %c0_i32, %arg1 : i32, i32, i32
  }
  func.func @transform_1(%arg0: i32, %arg1: i32) -> (i32, i32) {
    %c0_i32 = arith.constant 0 : i32
    %c0_i32_0 = arith.constant 0 : i32
    %c0_i32_1 = arith.constant 0 : i32
    return %c0_i32, %c0_i32_0 : i32, i32
  }
  func.func @transform_2(%arg0: i32, %arg1: i32) -> (i32, i32) {
    %c0_i32 = arith.constant 0 : i32
    %c0_i32_0 = arith.constant 0 : i32
    %c0_i32_1 = arith.constant 0 : i32
    return %c0_i32, %c0_i32_0 : i32, i32
  }
  func.func @transform_3(%arg0: i32, %arg1: i32) -> (i32, i32, i32) {
    %c0_i32 = arith.constant 0 : i32
    %c0_i32_0 = arith.constant 0 : i32
    return %arg0, %c0_i32, %arg1 : i32, i32, i32
  }
}

</mosaic_0001>

<llo_original>
// kernel: model_forward.1
$region0: #{model_forward.1}
  #allocation0 [shape = 'u32[]', space=smem, size = 0x4, offset = 0x4, fixed_abs, tag = 'smem constant byte address 0x4 - core index']
  #allocation1 [shape = 'u32[144,128]{1,0:T(1,128)}', space=vmem, size = 0x12000, scoped, tag = 'internal scratch']
  %s0 = inlined_call_operand.vmem [shape: f32[1,3,4096], index: 0, kind: input, shape index: {}]
  %s1 = inlined_call_operand.vmem [shape: f32[32,3], index: 1, kind: input, shape index: {}]
  %s2 = inlined_call_operand.vmem [shape: f32[32,1], index: 2, kind: input, shape index: {}]
  %s3 = inlined_call_operand.vmem [shape: f32[1,32,4096], index: 3, kind: output, shape index: {}]
  %s4 = sld [smem:[#allocation0]]
  $region22: #{model_forward.1} parent=0
    _
  %s6 = ssub.s32 1, %s4
  %s7 = scalar_select 0, %s6, %s4
  // Predicated region
  $region2: #{model_forward.1} parent=0 // pred_check
    _
  $region3: #{model_forward.1} parent=0 // pred_check_branch
    %9 = sbr.rel (0) target = $region5
  $region4: #{model_forward.1} parent=0 // pred_region
    _
  $region5: #{model_forward.1} parent=0 // pred_fallthru
    _
  // Predicated region
  $region6: #{model_forward.1} parent=0 // pred_check
    _
  $region7: #{model_forward.1} parent=0 // pred_check_branch
    %11 = sbr.rel (0) target = $region9
  $region8: #{model_forward.1} parent=0 // pred_region
    _
  $region9: #{model_forward.1} parent=0 // pred_fallthru
    _
  // Predicated region
  $region10: #{model_forward.1} parent=0 // pred_check
    _
  $region11: #{model_forward.1} parent=0 // pred_check_branch
    %13 = sbr.rel (0) target = $region13
  $region12: #{model_forward.1} parent=0 // pred_region
    _
  $region13: #{model_forward.1} parent=0 // pred_fallthru
    _
  %v14 = vld [vmem:[%s0] sm:$0x77]
  %v15 = vld [vmem:[%s0 + $0x8] sm:$0x77]
  %v16 = vld [vmem:[%s0 + $0x10] sm:$0x77]
  %v17 = vld [vmem:[%s0 + $0x18] sm:$0x77]
  %v18 = vld [vmem:[%s0 + $0x20] sm:$0x77]
  %v19 = vld [vmem:[%s0 + $0x28] sm:$0x77]
  %v20 = vld [vmem:[%s0 + $0x30] sm:$0x77]
  %v21 = vld [vmem:[%s0 + $0x38] sm:$0x77]
  %v22 = vld [vmem:[%s0 + $0x40] sm:$0x77]
  %v23 = vld [vmem:[%s0 + $0x48] sm:$0x77]
  %v24 = vld [vmem:[%s0 + $0x50] sm:$0x77]
  %v25 = vld [vmem:[%s0 + $0x58] sm:$0x77]
  %v26 = vld [vmem:[%s0 + $0x60] sm:$0x77]
  %v27 = vld [vmem:[%s0 + $0x68] sm:$0x77]
  %v28 = vld [vmem:[%s0 + $0x70] sm:$0x77]
  %v29 = vld [vmem:[%s0 + $0x78] sm:$0x77]
  %v30 = vld [vmem:[%s1] sm:$0xff]
  %v31 = vld [vmem:[%s1 + $0x8] sm:$0xff]
  %v32 = vld [vmem:[%s1 + $0x10] sm:$0xff]
  %v33 = vld [vmem:[%s1 + $0x18] sm:$0xff]
  %v34 = vld [vmem:[%s2] sm:$0xff]
  %v35 = vld [vmem:[%s2 + $0x8] sm:$0xff]
  %v36 = vld [vmem:[%s2 + $0x10] sm:$0xff]
  %v37 = vld [vmem:[%s2 + $0x18] sm:$0xff]
  %39 = vset.pattern.permute.xlu0 0
  %40 = vperm.xlu0 %39, %v30
  %v41 = vpop.permute.xlu0 %40
  %44 = vset.pattern.permute.xlu0 0
  %45 = vperm.xlu0 %44, %v31
  %v46 = vpop.permute.xlu0 %45
  %49 = vset.pattern.permute.xlu0 0
  %50 = vperm.xlu0 %49, %v32
  %v51 = vpop.permute.xlu0 %50
  %54 = vset.pattern.permute.xlu0 0
  %55 = vperm.xlu0 %54, %v33
  %v56 = vpop.permute.xlu0 %55
  %v74 = vlaneseq
  %v75 = vshrl.u32 %v74, 7
  %v76 = vsub.s32 0, %v75
  %v77 = vrot.slane %v14, %v76
  %v78 = vlaneseq
  %v79 = vshrl.u32 %v78, 7
  %v80 = vsub.s32 4, %v79
  %v81 = vrot.slane %v14, %v80
  %v82 = vlaneseq
  %v83 = vshrl.u32 %v82, 7
  %v84 = vsub.s32 0, %v83
  %v85 = vrot.slane %v15, %v84
  %v86 = vlaneseq
  %v87 = vshrl.u32 %v86, 7
  %v88 = vsub.s32 4, %v87
  %v89 = vrot.slane %v15, %v88
  %v90 = vlaneseq
  %v91 = vshrl.u32 %v90, 7
  %v92 = vsub.s32 0, %v91
  %v93 = vrot.slane %v16, %v92
  %v94 = vlaneseq
  %v95 = vshrl.u32 %v94, 7
  %v96 = vsub.s32 4, %v95
  %v97 = vrot.slane %v16, %v96
  %v98 = vlaneseq
  %v99 = vshrl.u32 %v98, 7
  %v100 = vsub.s32 0, %v99
  %v101 = vrot.slane %v17, %v100
  %v102 = vlaneseq
  %v103 = vshrl.u32 %v102, 7
  %v104 = vsub.s32 4, %v103
  %v105 = vrot.slane %v17, %v104
  %v106 = vlaneseq
  %v107 = vshrl.u32 %v106, 7
  %v108 = vsub.s32 0, %v107
  %v109 = vrot.slane %v18, %v108
  %v110 = vlaneseq
  %v111 = vshrl.u32 %v110, 7
  %v112 = vsub.s32 4, %v111
  %v113 = vrot.slane %v18, %v112
  %v114 = vlaneseq
  %v115 = vshrl.u32 %v114, 7
  %v116 = vsub.s32 0, %v115
  %v117 = vrot.slane %v19, %v116
  %v118 = vlaneseq
  %v119 = vshrl.u32 %v118, 7
  %v120 = vsub.s32 4, %v119
  %v121 = vrot.slane %v19, %v120
  %v122 = vlaneseq
  %v123 = vshrl.u32 %v122, 7
  %v124 = vsub.s32 0, %v123
  %v125 = vrot.slane %v20, %v124
  %v126 = vlaneseq
  %v127 = vshrl.u32 %v126, 7
  %v128 = vsub.s32 4, %v127
  %v129 = vrot.slane %v20, %v128
  %v130 = vlaneseq
  %v131 = vshrl.u32 %v130, 7
  %v132 = vsub.s32 0, %v131
  %v133 = vrot.slane %v21, %v132
  %v134 = vlaneseq
  %v135 = vshrl.u32 %v134, 7
  %v136 = vsub.s32 4, %v135
  %v137 = vrot.slane %v21, %v136
  %v138 = vlaneseq
  %v139 = vshrl.u32 %v138, 7
  %v140 = vsub.s32 0, %v139
  %v141 = vrot.slane %v22, %v140
  %v142 = vlaneseq
  %v143 = vshrl.u32 %v142, 7
  %v144 = vsub.s32 4, %v143
  %v145 = vrot.slane %v22, %v144
  %v146 = vlaneseq
  %v147 = vshrl.u32 %v146, 7
  %v148 = vsub.s32 0, %v147
  %v149 = vrot.slane %v23, %v148
  %v150 = vlaneseq
  %v151 = vshrl.u32 %v150, 7
  %v152 = vsub.s32 4, %v151
  %v153 = vrot.slane %v23, %v152
  %v154 = vlaneseq
  %v155 = vshrl.u32 %v154, 7
  %v156 = vsub.s32 0, %v155
  %v157 = vrot.slane %v24, %v156
  %v158 = vlaneseq
  %v159 = vshrl.u32 %v158, 7
  %v160 = vsub.s32 4, %v159
  %v161 = vrot.slane %v24, %v160
  %v162 = vlaneseq
  %v163 = vshrl.u32 %v162, 7
  %v164 = vsub.s32 0, %v163
  %v165 = vrot.slane %v25, %v164
  %v166 = vlaneseq
  %v167 = vshrl.u32 %v166, 7
  %v168 = vsub.s32 4, %v167
  %v169 = vrot.slane %v25, %v168
  %v170 = vlaneseq
  %v171 = vshrl.u32 %v170, 7
  %v172 = vsub.s32 0, %v171
  %v173 = vrot.slane %v26, %v172
  %v174 = vlaneseq
  %v175 = vshrl.u32 %v174, 7
  %v176 = vsub.s32 4, %v175
  %v177 = vrot.slane %v26, %v176
  %v178 = vlaneseq
  %v179 = vshrl.u32 %v178, 7
  %v180 = vsub.s32 0, %v179
  %v181 = vrot.slane %v27, %v180
  %v182 = vlaneseq
  %v183 = vshrl.u32 %v182, 7
  %v184 = vsub.s32 4, %v183
  %v185 = vrot.slane %v27, %v184
  %v186 = vlaneseq
  %v187 = vshrl.u32 %v186, 7
  %v188 = vsub.s32 0, %v187
  %v189 = vrot.slane %v28, %v188
  %v190 = vlaneseq
  %v191 = vshrl.u32 %v190, 7
  %v192 = vsub.s32 4, %v191
  %v193 = vrot.slane %v28, %v192
  %v194 = vlaneseq
  %v195 = vshrl.u32 %v194, 7
  %v196 = vsub.s32 0, %v195
  %v197 = vrot.slane %v29, %v196
  %v198 = vlaneseq
  %v199 = vshrl.u32 %v198, 7
  %v200 = vsub.s32 4, %v199
  %v201 = vrot.slane %v29, %v200
  %v234 = vlaneseq
  %v235 = vshrl.u32 %v234, 7
  %v236 = vsub.s32 0, %v235
  %v237 = vrot.slane %v77, %v236
  %v238 = vlaneseq
  %v239 = vshrl.u32 %v238, 7
  %v240 = vsub.s32 0, %v239
  %v241 = vrot.slane %v81, %v240
  %v242 = vlaneseq
  %v243 = vshrl.u32 %v242, 7
  %v244 = vsub.s32 0, %v243
  %v245 = vrot.slane %v85, %v244
  %v246 = vlaneseq
  %v247 = vshrl.u32 %v246, 7
  %v248 = vsub.s32 0, %v247
  %v249 = vrot.slane %v89, %v248
  %v250 = vlaneseq
  %v251 = vshrl.u32 %v250, 7
  %v252 = vsub.s32 0, %v251
  %v253 = vrot.slane %v93, %v252
  %v254 = vlaneseq
  %v255 = vshrl.u32 %v254, 7
  %v256 = vsub.s32 0, %v255
  %v257 = vrot.slane %v97, %v256
  %v258 = vlaneseq
  %v259 = vshrl.u32 %v258, 7
  %v260 = vsub.s32 0, %v259
  %v261 = vrot.slane %v101, %v260
  %v262 = vlaneseq
  %v263 = vshrl.u32 %v262, 7
  %v264 = vsub.s32 0, %v263
  %v265 = vrot.slane %v105, %v264
  %v266 = vlaneseq
  %v267 = vshrl.u32 %v266, 7
  %v268 = vsub.s32 0, %v267
  %v269 = vrot.slane %v109, %v268
  %v270 = vlaneseq
  %v271 = vshrl.u32 %v270, 7
  %v272 = vsub.s32 0, %v271
  %v273 = vrot.slane %v113, %v272
  %v274 = vlaneseq
  %v275 = vshrl.u32 %v274, 7
  %v276 = vsub.s32 0, %v275
  %v277 = vrot.slane %v117, %v276
  %v278 = vlaneseq
  %v279 = vshrl.u32 %v278, 7
  %v280 = vsub.s32 0, %v279
  %v281 = vrot.slane %v121, %v280
  %v282 = vlaneseq
  %v283 = vshrl.u32 %v282, 7
  %v284 = vsub.s32 0, %v283
  %v285 = vrot.slane %v125, %v284
  %v286 = vlaneseq
  %v287 = vshrl.u32 %v286, 7
  %v288 = vsub.s32 0, %v287
  %v289 = vrot.slane %v129, %v288
  %v290 = vlaneseq
  %v291 = vshrl.u32 %v290, 7
  %v292 = vsub.s32 0, %v291
  %v293 = vrot.slane %v133, %v292
  %v294 = vlaneseq
  %v295 = vshrl.u32 %v294, 7
  %v296 = vsub.s32 0, %v295
  %v297 = vrot.slane %v137, %v296
  %v298 = vlaneseq
  %v299 = vshrl.u32 %v298, 7
  %v300 = vsub.s32 0, %v299
  %v301 = vrot.slane %v141, %v300
  %v302 = vlaneseq
  %v303 = vshrl.u32 %v302, 7
  %v304 = vsub.s32 0, %v303
  %v305 = vrot.slane %v145, %v304
  %v306 = vlaneseq
  %v307 = vshrl.u32 %v306, 7
  %v308 = vsub.s32 0, %v307
  %v309 = vrot.slane %v149, %v308
  %v310 = vlaneseq
  %v311 = vshrl.u32 %v310, 7
  %v312 = vsub.s32 0, %v311
  %v313 = vrot.slane %v153, %v312
  %v314 = vlaneseq
  %v315 = vshrl.u32 %v314, 7
  %v316 = vsub.s32 0, %v315
  %v317 = vrot.slane %v157, %v316
  %v318 = vlaneseq
  %v319 = vshrl.u32 %v318, 7
  %v320 = vsub.s32 0, %v319
  %v321 = vrot.slane %v161, %v320
  %v322 = vlaneseq
  %v323 = vshrl.u32 %v322, 7
  %v324 = vsub.s32 0, %v323
  %v325 = vrot.slane %v165, %v324
  %v326 = vlaneseq
  %v327 = vshrl.u32 %v326, 7
  %v328 = vsub.s32 0, %v327
  %v329 = vrot.slane %v169, %v328
  %v330 = vlaneseq
  %v331 = vshrl.u32 %v330, 7
  %v332 = vsub.s32 0, %v331
  %v333 = vrot.slane %v173, %v332
  %v334 = vlaneseq
  %v335 = vshrl.u32 %v334, 7
  %v336 = vsub.s32 0, %v335
  %v337 = vrot.slane %v177, %v336
  %v338 = vlaneseq
  %v339 = vshrl.u32 %v338, 7
  %v340 = vsub.s32 0, %v339
  %v341 = vrot.slane %v181, %v340
  %v342 = vlaneseq
  %v343 = vshrl.u32 %v342, 7
  %v344 = vsub.s32 0, %v343
  %v345 = vrot.slane %v185, %v344
  %v346 = vlaneseq
  %v347 = vshrl.u32 %v346, 7
  %v348 = vsub.s32 0, %v347
  %v349 = vrot.slane %v189, %v348
  %v350 = vlaneseq
  %v351 = vshrl.u32 %v350, 7
  %v352 = vsub.s32 0, %v351
  %v353 = vrot.slane %v193, %v352
  %v354 = vlaneseq
  %v355 = vshrl.u32 %v354, 7
  %v356 = vsub.s32 0, %v355
  %v357 = vrot.slane %v197, %v356
  %v358 = vlaneseq
  %v359 = vshrl.u32 %v358, 7
  %v360 = vsub.s32 0, %v359
  %v361 = vrot.slane %v201, %v360
  %v362 = vmul.f32 %v41, %v237
  %v363 = vmul.f32 %v41, %v241
  %v364 = vmul.f32 %v41, %v245
  %v365 = vmul.f32 %v41, %v249
  %v366 = vmul.f32 %v41, %v253
  %v367 = vmul.f32 %v41, %v257
  %v368 = vmul.f32 %v41, %v261
  %v369 = vmul.f32 %v41, %v265
  %v370 = vmul.f32 %v41, %v269
  %v371 = vmul.f32 %v41, %v273
  %v372 = vmul.f32 %v41, %v277
  %v373 = vmul.f32 %v41, %v281
  %v374 = vmul.f32 %v41, %v285
  %v375 = vmul.f32 %v41, %v289
  %v376 = vmul.f32 %v41, %v293
  %v377 = vmul.f32 %v41, %v297
  %v378 = vmul.f32 %v41, %v301
  %v379 = vmul.f32 %v41, %v305
  %v380 = vmul.f32 %v41, %v309
  %v381 = vmul.f32 %v41, %v313
  %v382 = vmul.f32 %v41, %v317
  %v383 = vmul.f32 %v41, %v321
  %v384 = vmul.f32 %v41, %v325
  %v385 = vmul.f32 %v41, %v329
  %v386 = vmul.f32 %v41, %v333
  %v387 = vmul.f32 %v41, %v337
  %v388 = vmul.f32 %v41, %v341
  %v389 = vmul.f32 %v41, %v345
  %v390 = vmul.f32 %v41, %v349
  %v391 = vmul.f32 %v41, %v353
  %v392 = vmul.f32 %v41, %v357
  %v393 = vmul.f32 %v41, %v361
  %v394 = vmul.f32 %v46, %v237
  %v395 = vmul.f32 %v46, %v241
  %v396 = vmul.f32 %v46, %v245
  %v397 = vmul.f32 %v46, %v249
  %v398 = vmul.f32 %v46, %v253
  %v399 = vmul.f32 %v46, %v257
  %v400 = vmul.f32 %v46, %v261
  %v401 = vmul.f32 %v46, %v265
  %v402 = vmul.f32 %v46, %v269
  %v403 = vmul.f32 %v46, %v273
  %v404 = vmul.f32 %v46, %v277
  %v405 = vmul.f32 %v46, %v281
  %v406 = vmul.f32 %v46, %v285
  %v407 = vmul.f32 %v46, %v289
  %v408 = vmul.f32 %v46, %v293
  %v409 = vmul.f32 %v46, %v297
  %v410 = vmul.f32 %v46, %v301
  %v411 = vmul.f32 %v46, %v305
  %v412 = vmul.f32 %v46, %v309
  %v413 = vmul.f32 %v46, %v313
  %v414 = vmul.f32 %v46, %v317
  %v415 = vmul.f32 %v46, %v321
  %v416 = vmul.f32 %v46, %v325
  %v417 = vmul.f32 %v46, %v329
  %v418 = vmul.f32 %v46, %v333
  %v419 = vmul.f32 %v46, %v337
  %v420 = vmul.f32 %v46, %v341
  %v421 = vmul.f32 %v46, %v345
  %v422 = vmul.f32 %v46, %v349
  %v423 = vmul.f32 %v46, %v353
  %v424 = vmul.f32 %v46, %v357
  %v425 = vmul.f32 %v46, %v361
  %v426 = vmul.f32 %v51, %v237
  %v427 = vmul.f32 %v51, %v241
  %v428 = vmul.f32 %v51, %v245
  %v429 = vmul.f32 %v51, %v249
  %v430 = vmul.f32 %v51, %v253
  %v431 = vmul.f32 %v51, %v257
  %v432 = vmul.f32 %v51, %v261
  %v433 = vmul.f32 %v51, %v265
  %v434 = vmul.f32 %v51, %v269
  %v435 = vmul.f32 %v51, %v273
  %v436 = vmul.f32 %v51, %v277
  %v437 = vmul.f32 %v51, %v281
  %v438 = vmul.f32 %v51, %v285
  %v439 = vmul.f32 %v51, %v289
  %v440 = vmul.f32 %v51, %v293
  %v441 = vmul.f32 %v51, %v297
  %v442 = vmul.f32 %v51, %v301
  %v443 = vmul.f32 %v51, %v305
  %v444 = vmul.f32 %v51, %v309
  %v445 = vmul.f32 %v51, %v313
  %v446 = vmul.f32 %v51, %v317
  %v447 = vmul.f32 %v51, %v321
  %v448 = vmul.f32 %v51, %v325
  %v449 = vmul.f32 %v51, %v329
  %v450 = vmul.f32 %v51, %v333
  %v451 = vmul.f32 %v51, %v337
  %v452 = vmul.f32 %v51, %v341
  %v453 = vmul.f32 %v51, %v345
  %v454 = vmul.f32 %v51, %v349
  %v455 = vmul.f32 %v51, %v353
  %v456 = vmul.f32 %v51, %v357
  %v457 = vmul.f32 %v51, %v361
  %v458 = vmul.f32 %v56, %v237
  %v459 = vmul.f32 %v56, %v241
  %v460 = vmul.f32 %v56, %v245
  %v461 = vmul.f32 %v56, %v249
  %v462 = vmul.f32 %v56, %v253
  %v463 = vmul.f32 %v56, %v257
  %v464 = vmul.f32 %v56, %v261
  %v465 = vmul.f32 %v56, %v265
  %v466 = vmul.f32 %v56, %v269
  %v467 = vmul.f32 %v56, %v273
  %v468 = vmul.f32 %v56, %v277
  %v469 = vmul.f32 %v56, %v281
  %v470 = vmul.f32 %v56, %v285
  %v471 = vmul.f32 %v56, %v289
  %v472 = vmul.f32 %v56, %v293
  %v473 = vmul.f32 %v56, %v297
  %v474 = vmul.f32 %v56, %v301
  %v475 = vmul.f32 %v56, %v305
  %v476 = vmul.f32 %v56, %v309
  %v477 = vmul.f32 %v56, %v313
  %v478 = vmul.f32 %v56, %v317
  %v479 = vmul.f32 %v56, %v321
  %v480 = vmul.f32 %v56, %v325
  %v481 = vmul.f32 %v56, %v329
  %v482 = vmul.f32 %v56, %v333
  %v483 = vmul.f32 %v56, %v337
  %v484 = vmul.f32 %v56, %v341
  %v485 = vmul.f32 %v56, %v345
  %v486 = vmul.f32 %v56, %v349
  %v487 = vmul.f32 %v56, %v353
  %v488 = vmul.f32 %v56, %v357
  %v489 = vmul.f32 %v56, %v361
  %491 = vset.pattern.permute.xlu0 0
  %492 = vperm.xlu0 %491, %v34
  %v493 = vpop.permute.xlu0 %492
  %496 = vset.pattern.permute.xlu0 0
  %497 = vperm.xlu0 %496, %v35
  %v498 = vpop.permute.xlu0 %497
  %501 = vset.pattern.permute.xlu0 0
  %502 = vperm.xlu0 %501, %v36
  %v503 = vpop.permute.xlu0 %502
  %506 = vset.pattern.permute.xlu0 0
  %507 = vperm.xlu0 %506, %v37
  %v508 = vpop.permute.xlu0 %507
  %v510 = vadd.f32 %v493, %v362
  %v511 = vadd.f32 %v493, %v363
  %v512 = vadd.f32 %v493, %v364
  %v513 = vadd.f32 %v493, %v365
  %v514 = vadd.f32 %v493, %v366
  %v515 = vadd.f32 %v493, %v367
  %v516 = vadd.f32 %v493, %v368
  %v517 = vadd.f32 %v493, %v369
  %v518 = vadd.f32 %v493, %v370
  %v519 = vadd.f32 %v493, %v371
  %v520 = vadd.f32 %v493, %v372
  %v521 = vadd.f32 %v493, %v373
  %v522 = vadd.f32 %v493, %v374
  %v523 = vadd.f32 %v493, %v375
  %v524 = vadd.f32 %v493, %v376
  %v525 = vadd.f32 %v493, %v377
  %v526 = vadd.f32 %v493, %v378
  %v527 = vadd.f32 %v493, %v379
  %v528 = vadd.f32 %v493, %v380
  %v529 = vadd.f32 %v493, %v381
  %v530 = vadd.f32 %v493, %v382
  %v531 = vadd.f32 %v493, %v383
  %v532 = vadd.f32 %v493, %v384
  %v533 = vadd.f32 %v493, %v385
  %v534 = vadd.f32 %v493, %v386
  %v535 = vadd.f32 %v493, %v387
  %v536 = vadd.f32 %v493, %v388
  %v537 = vadd.f32 %v493, %v389
  %v538 = vadd.f32 %v493, %v390
  %v539 = vadd.f32 %v493, %v391
  %v540 = vadd.f32 %v493, %v392
  %v541 = vadd.f32 %v493, %v393
  %v542 = vadd.f32 %v498, %v394
  %v543 = vadd.f32 %v498, %v395
  %v544 = vadd.f32 %v498, %v396
  %v545 = vadd.f32 %v498, %v397
  %v546 = vadd.f32 %v498, %v398
  %v547 = vadd.f32 %v498, %v399
  %v548 = vadd.f32 %v498, %v400
  %v549 = vadd.f32 %v498, %v401
  %v550 = vadd.f32 %v498, %v402
  %v551 = vadd.f32 %v498, %v403
  %v552 = vadd.f32 %v498, %v404
  %v553 = vadd.f32 %v498, %v405
  %v554 = vadd.f32 %v498, %v406
  %v555 = vadd.f32 %v498, %v407
  %v556 = vadd.f32 %v498, %v408
  %v557 = vadd.f32 %v498, %v409
  %v558 = vadd.f32 %v498, %v410
  %v559 = vadd.f32 %v498, %v411
  %v560 = vadd.f32 %v498, %v412
  %v561 = vadd.f32 %v498, %v413
  %v562 = vadd.f32 %v498, %v414
  %v563 = vadd.f32 %v498, %v415
  %v564 = vadd.f32 %v498, %v416
  %v565 = vadd.f32 %v498, %v417
  %v566 = vadd.f32 %v498, %v418
  %v567 = vadd.f32 %v498, %v419
  %v568 = vadd.f32 %v498, %v420
  %v569 = vadd.f32 %v498, %v421
  %v570 = vadd.f32 %v498, %v422
  %v571 = vadd.f32 %v498, %v423
  %v572 = vadd.f32 %v498, %v424
  %v573 = vadd.f32 %v498, %v425
  %v574 = vadd.f32 %v503, %v426
  %v575 = vadd.f32 %v503, %v427
  %v576 = vadd.f32 %v503, %v428
  %v577 = vadd.f32 %v503, %v429
  %v578 = vadd.f32 %v503, %v430
  %v579 = vadd.f32 %v503, %v431
  %v580 = vadd.f32 %v503, %v432
  %v581 = vadd.f32 %v503, %v433
  %v582 = vadd.f32 %v503, %v434
  %v583 = vadd.f32 %v503, %v435
  %v584 = vadd.f32 %v503, %v436
  %v585 = vadd.f32 %v503, %v437
  %v586 = vadd.f32 %v503, %v438
  %v587 = vadd.f32 %v503, %v439
  %v588 = vadd.f32 %v503, %v440
  %v589 = vadd.f32 %v503, %v441
  %v590 = vadd.f32 %v503, %v442
  %v591 = vadd.f32 %v503, %v443
  %v592 = vadd.f32 %v503, %v444
  %v593 = vadd.f32 %v503, %v445
  %v594 = vadd.f32 %v503, %v446
  %v595 = vadd.f32 %v503, %v447
  %v596 = vadd.f32 %v503, %v448
  %v597 = vadd.f32 %v503, %v449
  %v598 = vadd.f32 %v503, %v450
  %v599 = vadd.f32 %v503, %v451
  %v600 = vadd.f32 %v503, %v452
  %v601 = vadd.f32 %v503, %v453
  %v602 = vadd.f32 %v503, %v454
  %v603 = vadd.f32 %v503, %v455
  %v604 = vadd.f32 %v503, %v456
  %v605 = vadd.f32 %v503, %v457
  %v606 = vadd.f32 %v508, %v458
  %v607 = vadd.f32 %v508, %v459
  %v608 = vadd.f32 %v508, %v460
  %v609 = vadd.f32 %v508, %v461
  %v610 = vadd.f32 %v508, %v462
  %v611 = vadd.f32 %v508, %v463
  %v612 = vadd.f32 %v508, %v464
  %v613 = vadd.f32 %v508, %v465
  %v614 = vadd.f32 %v508, %v466
  %v615 = vadd.f32 %v508, %v467
  %v616 = vadd.f32 %v508, %v468
  %v617 = vadd.f32 %v508, %v469
  %v618 = vadd.f32 %v508, %v470
  %v619 = vadd.f32 %v508, %v471
  %v620 = vadd.f32 %v508, %v472
  %v621 = vadd.f32 %v508, %v473
  %v622 = vadd.f32 %v508, %v474
  %v623 = vadd.f32 %v508, %v475
  %v624 = vadd.f32 %v508, %v476
  %v625 = vadd.f32 %v508, %v477
  %v626 = vadd.f32 %v508, %v478
  %v627 = vadd.f32 %v508, %v479
  %v628 = vadd.f32 %v508, %v480
  %v629 = vadd.f32 %v508, %v481
  %v630 = vadd.f32 %v508, %v482
  %v631 = vadd.f32 %v508, %v483
  %v632 = vadd.f32 %v508, %v484
  %v633 = vadd.f32 %v508, %v485
  %v634 = vadd.f32 %v508, %v486
  %v635 = vadd.f32 %v508, %v487
  %v636 = vadd.f32 %v508, %v488
  %v637 = vadd.f32 %v508, %v489
  %638 = vset.pattern.permute.xlu0 1
  %639 = vperm.xlu0 %638, %v30
  %v640 = vpop.permute.xlu0 %639
  %642 = vset.pattern.permute.xlu0 1
  %643 = vperm.xlu0 %642, %v31
  %v644 = vpop.permute.xlu0 %643
  %646 = vset.pattern.permute.xlu0 1
  %647 = vperm.xlu0 %646, %v32
  %v648 = vpop.permute.xlu0 %647
  %650 = vset.pattern.permute.xlu0 1
  %651 = vperm.xlu0 %650, %v33
  %v652 = vpop.permute.xlu0 %651
  %v654 = vlaneseq
  %v655 = vshrl.u32 %v654, 7
  %v656 = vsub.s32 1, %v655
  %v657 = vrot.slane %v14, %v656
  %v658 = vlaneseq
  %v659 = vshrl.u32 %v658, 7
  %v660 = vsub.s32 5, %v659
  %v661 = vrot.slane %v14, %v660
  %v662 = vlaneseq
  %v663 = vshrl.u32 %v662, 7
  %v664 = vsub.s32 1, %v663
  %v665 = vrot.slane %v15, %v664
  %v666 = vlaneseq
  %v667 = vshrl.u32 %v666, 7
  %v668 = vsub.s32 5, %v667
  %v669 = vrot.slane %v15, %v668
  %v670 = vlaneseq
  %v671 = vshrl.u32 %v670, 7
  %v672 = vsub.s32 1, %v671
  %v673 = vrot.slane %v16, %v672
  %v674 = vlaneseq
  %v675 = vshrl.u32 %v674, 7
  %v676 = vsub.s32 5, %v675
  %v677 = vrot.slane %v16, %v676
  %v678 = vlaneseq
  %v679 = vshrl.u32 %v678, 7
  %v680 = vsub.s32 1, %v679
  %v681 = vrot.slane %v17, %v680
  %v682 = vlaneseq
  %v683 = vshrl.u32 %v682, 7
  %v684 = vsub.s32 5, %v683
  %v685 = vrot.slane %v17, %v684
  %v686 = vlaneseq
  %v687 = vshrl.u32 %v686, 7
  %v688 = vsub.s32 1, %v687
  %v689 = vrot.slane %v18, %v688
  %v690 = vlaneseq
  %v691 = vshrl.u32 %v690, 7
  %v692 = vsub.s32 5, %v691
  %v693 = vrot.slane %v18, %v692
  %v694 = vlaneseq
  %v695 = vshrl.u32 %v694, 7
  %v696 = vsub.s32 1, %v695
  %v697 = vrot.slane %v19, %v696
  %v698 = vlaneseq
  %v699 = vshrl.u32 %v698, 7
  %v700 = vsub.s32 5, %v699
  %v701 = vrot.slane %v19, %v700
  %v702 = vlaneseq
  %v703 = vshrl.u32 %v702, 7
  %v704 = vsub.s32 1, %v703
  %v705 = vrot.slane %v20, %v704
  %v706 = vlaneseq
  %v707 = vshrl.u32 %v706, 7
  %v708 = vsub.s32 5, %v707
  %v709 = vrot.slane %v20, %v708
  %v710 = vlaneseq
  %v711 = vshrl.u32 %v710, 7
  %v712 = vsub.s32 1, %v711
  %v713 = vrot.slane %v21, %v712
  %v714 = vlaneseq
  %v715 = vshrl.u32 %v714, 7
  %v716 = vsub.s32 5, %v715
  %v717 = vrot.slane %v21, %v716
  %v718 = vlaneseq
  %v719 = vshrl.u32 %v718, 7
  %v720 = vsub.s32 1, %v719
  %v721 = vrot.slane %v22, %v720
  %v722 = vlaneseq
  %v723 = vshrl.u32 %v722, 7
  %v724 = vsub.s32 5, %v723
  %v725 = vrot.slane %v22, %v724
  %v726 = vlaneseq
  %v727 = vshrl.u32 %v726, 7
  %v728 = vsub.s32 1, %v727
  %v729 = vrot.slane %v23, %v728
  %v730 = vlaneseq
  %v731 = vshrl.u32 %v730, 7
  %v732 = vsub.s32 5, %v731
  %v733 = vrot.slane %v23, %v732
  %v734 = vlaneseq
  %v735 = vshrl.u32 %v734, 7
  %v736 = vsub.s32 1, %v735
  %v737 = vrot.slane %v24, %v736
  %v738 = vlaneseq
  %v739 = vshrl.u32 %v738, 7
  %v740 = vsub.s32 5, %v739
  %v741 = vrot.slane %v24, %v740
  %v742 = vlaneseq
  %v743 = vshrl.u32 %v742, 7
  %v744 = vsub.s32 1, %v743
  %v745 = vrot.slane %v25, %v744
  %v746 = vlaneseq
  %v747 = vshrl.u32 %v746, 7
  %v748 = vsub.s32 5, %v747
  %v749 = vrot.slane %v25, %v748
  %v750 = vlaneseq
  %v751 = vshrl.u32 %v750, 7
  %v752 = vsub.s32 1, %v751
  %v753 = vrot.slane %v26, %v752
  %v754 = vlaneseq
  %v755 = vshrl.u32 %v754, 7
  %v756 = vsub.s32 5, %v755
  %v757 = vrot.slane %v26, %v756
  %v758 = vlaneseq
  %v759 = vshrl.u32 %v758, 7
  %v760 = vsub.s32 1, %v759
  %v761 = vrot.slane %v27, %v760
  %v762 = vlaneseq
  %v763 = vshrl.u32 %v762, 7
  %v764 = vsub.s32 5, %v763
  %v765 = vrot.slane %v27, %v764
  %v766 = vlaneseq
  %v767 = vshrl.u32 %v766, 7
  %v768 = vsub.s32 1, %v767
  %v769 = vrot.slane %v28, %v768
  %v770 = vlaneseq
  %v771 = vshrl.u32 %v770, 7
  %v772 = vsub.s32 5, %v771
  %v773 = vrot.slane %v28, %v772
  %v774 = vlaneseq
  %v775 = vshrl.u32 %v774, 7
  %v776 = vsub.s32 1, %v775
  %v777 = vrot.slane %v29, %v776
  %v778 = vlaneseq
  %v779 = vshrl.u32 %v778, 7
  %v780 = vsub.s32 5, %v779
  %v781 = vrot.slane %v29, %v780
  %v814 = vlaneseq
  %v815 = vshrl.u32 %v814, 7
  %v816 = vsub.s32 1, %v815
  %v817 = vrot.slane %v657, %v816
  %v818 = vlaneseq
  %v819 = vshrl.u32 %v818, 7
  %v820 = vsub.s32 1, %v819
  %v821 = vrot.slane %v661, %v820
  %v822 = vlaneseq
  %v823 = vshrl.u32 %v822, 7
  %v824 = vsub.s32 1, %v823
  %v825 = vrot.slane %v665, %v824
  %v826 = vlaneseq
  %v827 = vshrl.u32 %v826, 7
  %v828 = vsub.s32 1, %v827
  %v829 = vrot.slane %v669, %v828
  %v830 = vlaneseq
  %v831 = vshrl.u32 %v830, 7
  %v832 = vsub.s32 1, %v831
  %v833 = vrot.slane %v673, %v832
  %v834 = vlaneseq
  %v835 = vshrl.u32 %v834, 7
  %v836 = vsub.s32 1, %v835
  %v837 = vrot.slane %v677, %v836
  %v838 = vlaneseq
  %v839 = vshrl.u32 %v838, 7
  %v840 = vsub.s32 1, %v839
  %v841 = vrot.slane %v681, %v840
  %v842 = vlaneseq
  %v843 = vshrl.u32 %v842, 7
  %v844 = vsub.s32 1, %v843
  %v845 = vrot.slane %v685, %v844
  %v846 = vlaneseq
  %v847 = vshrl.u32 %v846, 7
  %v848 = vsub.s32 1, %v847
  %v849 = vrot.slane %v689, %v848
  %v850 = vlaneseq
  %v851 = vshrl.u32 %v850, 7
  %v852 = vsub.s32 1, %v851
  %v853 = vrot.slane %v693, %v852
  %v854 = vlaneseq
  %v855 = vshrl.u32 %v854, 7
  %v856 = vsub.s32 1, %v855
  %v857 = vrot.slane %v697, %v856
  %v858 = vlaneseq
  %v859 = vshrl.u32 %v858, 7
  %v860 = vsub.s32 1, %v859
  %v861 = vrot.slane %v701, %v860
  %v862 = vlaneseq
  %v863 = vshrl.u32 %v862, 7
  %v864 = vsub.s32 1, %v863
  %v865 = vrot.slane %v705, %v864
  %v866 = vlaneseq
  %v867 = vshrl.u32 %v866, 7
  %v868 = vsub.s32 1, %v867
  %v869 = vrot.slane %v709, %v868
  %v870 = vlaneseq
  %v871 = vshrl.u32 %v870, 7
  %v872 = vsub.s32 1, %v871
  %v873 = vrot.slane %v713, %v872
  %v874 = vlaneseq
  %v875 = vshrl.u32 %v874, 7
  %v876 = vsub.s32 1, %v875
  %v877 = vrot.slane %v717, %v876
  %v878 = vlaneseq
  %v879 = vshrl.u32 %v878, 7
  %v880 = vsub.s32 1, %v879
  %v881 = vrot.slane %v721, %v880
  %v882 = vlaneseq
  %v883 = vshrl.u32 %v882, 7
  %v884 = vsub.s32 1, %v883
  %v885 = vrot.slane %v725, %v884
  %v886 = vlaneseq
  %v887 = vshrl.u32 %v886, 7
  %v888 = vsub.s32 1, %v887
  %v889 = vrot.slane %v729, %v888
  %v890 = vlaneseq
  %v891 = vshrl.u32 %v890, 7
  %v892 = vsub.s32 1, %v891
  %v893 = vrot.slane %v733, %v892
  %v894 = vlaneseq
  %v895 = vshrl.u32 %v894, 7
  %v896 = vsub.s32 1, %v895
  %v897 = vrot.slane %v737, %v896
  %v898 = vlaneseq
  %v899 = vshrl.u32 %v898, 7
  %v900 = vsub.s32 1, %v899
  %v901 = vrot.slane %v741, %v900
  %v902 = vlaneseq
  %v903 = vshrl.u32 %v902, 7
  %v904 = vsub.s32 1, %v903
  %v905 = vrot.slane %v745, %v904
  %v906 = vlaneseq
  %v907 = vshrl.u32 %v906, 7
  %v908 = vsub.s32 1, %v907
  %v909 = vrot.slane %v749, %v908
  %v910 = vlaneseq
  %v911 = vshrl.u32 %v910, 7
  %v912 = vsub.s32 1, %v911
  %v913 = vrot.slane %v753, %v912
  %v914 = vlaneseq
  %v915 = vshrl.u32 %v914, 7
  %v916 = vsub.s32 1, %v915
  %v917 = vrot.slane %v757, %v916
  %v918 = vlaneseq
  %v919 = vshrl.u32 %v918, 7
  %v920 = vsub.s32 1, %v919
  %v921 = vrot.slane %v761, %v920
  %v922 = vlaneseq
  %v923 = vshrl.u32 %v922, 7
  %v924 = vsub.s32 1, %v923
  %v925 = vrot.slane %v765, %v924
  %v926 = vlaneseq
  %v927 = vshrl.u32 %v926, 7
  %v928 = vsub.s32 1, %v927
  %v929 = vrot.slane %v769, %v928
  %v930 = vlaneseq
  %v931 = vshrl.u32 %v930, 7
  %v932 = vsub.s32 1, %v931
  %v933 = vrot.slane %v773, %v932
  %v934 = vlaneseq
  %v935 = vshrl.u32 %v934, 7
  %v936 = vsub.s32 1, %v935
  %v937 = vrot.slane %v777, %v936
  %v938 = vlaneseq
  %v939 = vshrl.u32 %v938, 7
  %v940 = vsub.s32 1, %v939
  %v941 = vrot.slane %v781, %v940
  %v942 = vmul.f32 %v640, %v817
  %v943 = vmul.f32 %v640, %v821
  %v944 = vmul.f32 %v640, %v825
  %v945 = vmul.f32 %v640, %v829
  %v946 = vmul.f32 %v640, %v833
  %v947 = vmul.f32 %v640, %v837
  %v948 = vmul.f32 %v640, %v841
  %v949 = vmul.f32 %v640, %v845
  %v950 = vmul.f32 %v640, %v849
  %v951 = vmul.f32 %v640, %v853
  %v952 = vmul.f32 %v640, %v857
  %v953 = vmul.f32 %v640, %v861
  %v954 = vmul.f32 %v640, %v865
  %v955 = vmul.f32 %v640, %v869
  %v956 = vmul.f32 %v640, %v873
  %v957 = vmul.f32 %v640, %v877
  %v958 = vmul.f32 %v640, %v881
  %v959 = vmul.f32 %v640, %v885
  %v960 = vmul.f32 %v640, %v889
  %v961 = vmul.f32 %v640, %v893
  %v962 = vmul.f32 %v640, %v897
  %v963 = vmul.f32 %v640, %v901
  %v964 = vmul.f32 %v640, %v905
  %v965 = vmul.f32 %v640, %v909
  %v966 = vmul.f32 %v640, %v913
  %v967 = vmul.f32 %v640, %v917
  %v968 = vmul.f32 %v640, %v921
  %v969 = vmul.f32 %v640, %v925
  %v970 = vmul.f32 %v640, %v929
  %v971 = vmul.f32 %v640, %v933
  %v972 = vmul.f32 %v640, %v937
  %v973 = vmul.f32 %v640, %v941
  %v974 = vmul.f32 %v644, %v817
  %v975 = vmul.f32 %v644, %v821
  %v976 = vmul.f32 %v644, %v825
  %v977 = vmul.f32 %v644, %v829
  %v978 = vmul.f32 %v644, %v833
  %v979 = vmul.f32 %v644, %v837
  %v980 = vmul.f32 %v644, %v841
  %v981 = vmul.f32 %v644, %v845
  %v982 = vmul.f32 %v644, %v849
  %v983 = vmul.f32 %v644, %v853
  %v984 = vmul.f32 %v644, %v857
  %v985 = vmul.f32 %v644, %v861
  %v986 = vmul.f32 %v644, %v865
  %v987 = vmul.f32 %v644, %v869
  %v988 = vmul.f32 %v644, %v873
  %v989 = vmul.f32 %v644, %v877
  %v990 = vmul.f32 %v644, %v881
  %v991 = vmul.f32 %v644, %v885
  %v992 = vmul.f32 %v644, %v889
  %v993 = vmul.f32 %v644, %v893
  %v994 = vmul.f32 %v644, %v897
  %v995 = vmul.f32 %v644, %v901
  %v996 = vmul.f32 %v644, %v905
  %v997 = vmul.f32 %v644, %v909
  %v998 = vmul.f32 %v644, %v913
  %v999 = vmul.f32 %v644, %v917
  %v1000 = vmul.f32 %v644, %v921
  %v1001 = vmul.f32 %v644, %v925
  %v1002 = vmul.f32 %v644, %v929
  %v1003 = vmul.f32 %v644, %v933
  %v1004 = vmul.f32 %v644, %v937
  %v1005 = vmul.f32 %v644, %v941
  %v1006 = vmul.f32 %v648, %v817
  %v1007 = vmul.f32 %v648, %v821
  %v1008 = vmul.f32 %v648, %v825
  %v1009 = vmul.f32 %v648, %v829
  %v1010 = vmul.f32 %v648, %v833
  %v1011 = vmul.f32 %v648, %v837
  %v1012 = vmul.f32 %v648, %v841
  %v1013 = vmul.f32 %v648, %v845
  %v1014 = vmul.f32 %v648, %v849
  %v1015 = vmul.f32 %v648, %v853
  %v1016 = vmul.f32 %v648, %v857
  %v1017 = vmul.f32 %v648, %v861
  %v1018 = vmul.f32 %v648, %v865
  %v1019 = vmul.f32 %v648, %v869
  %v1020 = vmul.f32 %v648, %v873
  %v1021 = vmul.f32 %v648, %v877
  %v1022 = vmul.f32 %v648, %v881
  %v1023 = vmul.f32 %v648, %v885
  %v1024 = vmul.f32 %v648, %v889
  %v1025 = vmul.f32 %v648, %v893
  %v1026 = vmul.f32 %v648, %v897
  %v1027 = vmul.f32 %v648, %v901
  %v1028 = vmul.f32 %v648, %v905
  %v1029 = vmul.f32 %v648, %v909
  %v1030 = vmul.f32 %v648, %v913
  %v1031 = vmul.f32 %v648, %v917
  %v1032 = vmul.f32 %v648, %v921
  %v1033 = vmul.f32 %v648, %v925
  %v1034 = vmul.f32 %v648, %v929
  %v1035 = vmul.f32 %v648, %v933
  %v1036 = vmul.f32 %v648, %v937
  %v1037 = vmul.f32 %v648, %v941
  %v1038 = vmul.f32 %v652, %v817
  %v1039 = vmul.f32 %v652, %v821
  %v1040 = vmul.f32 %v652, %v825
  %v1041 = vmul.f32 %v652, %v829
  %v1042 = vmul.f32 %v652, %v833
  %v1043 = vmul.f32 %v652, %v837
  %v1044 = vmul.f32 %v652, %v841
  %v1045 = vmul.f32 %v652, %v845
  %v1046 = vmul.f32 %v652, %v849
  %v1047 = vmul.f32 %v652, %v853
  %v1048 = vmul.f32 %v652, %v857
  %v1049 = vmul.f32 %v652, %v861
  %v1050 = vmul.f32 %v652, %v865
  %v1051 = vmul.f32 %v652, %v869
  %v1052 = vmul.f32 %v652, %v873
  %v1053 = vmul.f32 %v652, %v877
  %v1054 = vmul.f32 %v652, %v881
  %v1055 = vmul.f32 %v652, %v885
  %v1056 = vmul.f32 %v652, %v889
  %v1057 = vmul.f32 %v652, %v893
  %v1058 = vmul.f32 %v652, %v897
  %v1059 = vmul.f32 %v652, %v901
  %v1060 = vmul.f32 %v652, %v905
  %v1061 = vmul.f32 %v652, %v909
  %v1062 = vmul.f32 %v652, %v913
  %v1063 = vmul.f32 %v652, %v917
  %v1064 = vmul.f32 %v652, %v921
  %v1065 = vmul.f32 %v652, %v925
  %v1066 = vmul.f32 %v652, %v929
  %v1067 = vmul.f32 %v652, %v933
  %v1068 = vmul.f32 %v652, %v937
  %v1069 = vmul.f32 %v652, %v941
  %v1070 = vadd.f32 %v510, %v942
  %v1071 = vadd.f32 %v511, %v943
  %v1072 = vadd.f32 %v512, %v944
  %v1073 = vadd.f32 %v513, %v945
  %v1074 = vadd.f32 %v514, %v946
  %v1075 = vadd.f32 %v515, %v947
  %v1076 = vadd.f32 %v516, %v948
  %v1077 = vadd.f32 %v517, %v949
  %v1078 = vadd.f32 %v518, %v950
  %v1079 = vadd.f32 %v519, %v951
  %v1080 = vadd.f32 %v520, %v952
  %v1081 = vadd.f32 %v521, %v953
  %v1082 = vadd.f32 %v522, %v954
  %v1083 = vadd.f32 %v523, %v955
  %v1084 = vadd.f32 %v524, %v956
  %v1085 = vadd.f32 %v525, %v957
  %v1086 = vadd.f32 %v526, %v958
  %v1087 = vadd.f32 %v527, %v959
  %v1088 = vadd.f32 %v528, %v960
  %v1089 = vadd.f32 %v529, %v961
  %v1090 = vadd.f32 %v530, %v962
  %v1091 = vadd.f32 %v531, %v963
  %v1092 = vadd.f32 %v532, %v964
  %v1093 = vadd.f32 %v533, %v965
  %v1094 = vadd.f32 %v534, %v966
  %v1095 = vadd.f32 %v535, %v967
  %v1096 = vadd.f32 %v536, %v968
  %v1097 = vadd.f32 %v537, %v969
  %v1098 = vadd.f32 %v538, %v970
  %v1099 = vadd.f32 %v539, %v971
  %v1100 = vadd.f32 %v540, %v972
  %v1101 = vadd.f32 %v541, %v973
  %v1102 = vadd.f32 %v542, %v974
  %v1103 = vadd.f32 %v543, %v975
  %v1104 = vadd.f32 %v544, %v976
  %v1105 = vadd.f32 %v545, %v977
  %v1106 = vadd.f32 %v546, %v978
  %v1107 = vadd.f32 %v547, %v979
  %v1108 = vadd.f32 %v548, %v980
  %v1109 = vadd.f32 %v549, %v981
  %v1110 = vadd.f32 %v550, %v982
  %v1111 = vadd.f32 %v551, %v983
  %v1112 = vadd.f32 %v552, %v984
  %v1113 = vadd.f32 %v553, %v985
  %v1114 = vadd.f32 %v554, %v986
  %v1115 = vadd.f32 %v555, %v987
  %v1116 = vadd.f32 %v556, %v988
  %v1117 = vadd.f32 %v557, %v989
  %v1118 = vadd.f32 %v558, %v990
  %v1119 = vadd.f32 %v559, %v991
  %v1120 = vadd.f32 %v560, %v992
  %v1121 = vadd.f32 %v561, %v993
  %v1122 = vadd.f32 %v562, %v994
  %v1123 = vadd.f32 %v563, %v995
  %v1124 = vadd.f32 %v564, %v996
  %v1125 = vadd.f32 %v565, %v997
  %v1126 = vadd.f32 %v566, %v998
  %v1127 = vadd.f32 %v567, %v999
  %v1128 = vadd.f32 %v568, %v1000
  %v1129 = vadd.f32 %v569, %v1001
  %v1130 = vadd.f32 %v570, %v1002
  %v1131 = vadd.f32 %v571, %v1003
  %v1132 = vadd.f32 %v572, %v1004
  %v1133 = vadd.f32 %v573, %v1005
  %v1134 = vadd.f32 %v574, %v1006
  %v1135 = vadd.f32 %v575, %v1007
  %v1136 = vadd.f32 %v576, %v1008
  %v1137 = vadd.f32 %v577, %v1009
  %v1138 = vadd.f32 %v578, %v1010
  %v1139 = vadd.f32 %v579, %v1011
  %v1140 = vadd.f32 %v580, %v1012
  %v1141 = vadd.f32 %v581, %v1013
  %v1142 = vadd.f32 %v582, %v1014
  %v1143 = vadd.f32 %v583, %v1015
  %v1144 = vadd.f32 %v584, %v1016
  %v1145 = vadd.f32 %v585, %v1017
  %v1146 = vadd.f32 %v586, %v1018
  %v1147 = vadd.f32 %v587, %v1019
  %v1148 = vadd.f32 %v588, %v1020
  %v1149 = vadd.f32 %v589, %v1021
  %v1150 = vadd.f32 %v590, %v1022
  %v1151 = vadd.f32 %v591, %v1023
  %v1152 = vadd.f32 %v592, %v1024
  %v1153 = vadd.f32 %v593, %v1025
  %v1154 = vadd.f32 %v594, %v1026
  %v1155 = vadd.f32 %v595, %v1027
  %v1156 = vadd.f32 %v596, %v1028
  %v1157 = vadd.f32 %v597, %v1029
  %v1158 = vadd.f32 %v598, %v1030
  %v1159 = vadd.f32 %v599, %v1031
  %v1160 = vadd.f32 %v600, %v1032
  %v1161 = vadd.f32 %v601, %v1033
  %v1162 = vadd.f32 %v602, %v1034
  %v1163 = vadd.f32 %v603, %v1035
  %v1164 = vadd.f32 %v604, %v1036
  %v1165 = vadd.f32 %v605, %v1037
  %v1166 = vadd.f32 %v606, %v1038
  %v1167 = vadd.f32 %v607, %v1039
  %v1168 = vadd.f32 %v608, %v1040
  %v1169 = vadd.f32 %v609, %v1041
  %v1170 = vadd.f32 %v610, %v1042
  %v1171 = vadd.f32 %v611, %v1043
  %v1172 = vadd.f32 %v612, %v1044
  %v1173 = vadd.f32 %v613, %v1045
  %v1174 = vadd.f32 %v614, %v1046
  %v1175 = vadd.f32 %v615, %v1047
  %v1176 = vadd.f32 %v616, %v1048
  %v1177 = vadd.f32 %v617, %v1049
  %v1178 = vadd.f32 %v618, %v1050
  %v1179 = vadd.f32 %v619, %v1051
  %v1180 = vadd.f32 %v620, %v1052
  %v1181 = vadd.f32 %v621, %v1053
  %v1182 = vadd.f32 %v622, %v1054
  %v1183 = vadd.f32 %v623, %v1055
  %v1184 = vadd.f32 %v624, %v1056
  %v1185 = vadd.f32 %v625, %v1057
  %v1186 = vadd.f32 %v626, %v1058
  %v1187 = vadd.f32 %v627, %v1059
  %v1188 = vadd.f32 %v628, %v1060
  %v1189 = vadd.f32 %v629, %v1061
  %v1190 = vadd.f32 %v630, %v1062
  %v1191 = vadd.f32 %v631, %v1063
  %v1192 = vadd.f32 %v632, %v1064
  %v1193 = vadd.f32 %v633, %v1065
  %v1194 = vadd.f32 %v634, %v1066
  %v1195 = vadd.f32 %v635, %v1067
  %v1196 = vadd.f32 %v636, %v1068
  %v1197 = vadd.f32 %v637, %v1069
  %1198 = vset.pattern.permute.xlu0 2
  %1199 = vperm.xlu0 %1198, %v30
  %v1200 = vpop.permute.xlu0 %1199
  %1202 = vset.pattern.permute.xlu0 2
  %1203 = vperm.xlu0 %1202, %v31
  %v1204 = vpop.permute.xlu0 %1203
  %1206 = vset.pattern.permute.xlu0 2
  %1207 = vperm.xlu0 %1206, %v32
  %v1208 = vpop.permute.xlu0 %1207
  %1210 = vset.pattern.permute.xlu0 2
  %1211 = vperm.xlu0 %1210, %v33
  %v1212 = vpop.permute.xlu0 %1211
  %v1214 = vlaneseq
  %v1215 = vshrl.u32 %v1214, 7
  %v1216 = vsub.s32 2, %v1215
  %v1217 = vrot.slane %v14, %v1216
  %v1218 = vlaneseq
  %v1219 = vshrl.u32 %v1218, 7
  %v1220 = vsub.s32 6, %v1219
  %v1221 = vrot.slane %v14, %v1220
  %v1222 = vlaneseq
  %v1223 = vshrl.u32 %v1222, 7
  %v1224 = vsub.s32 2, %v1223
  %v1225 = vrot.slane %v15, %v1224
  %v1226 = vlaneseq
  %v1227 = vshrl.u32 %v1226, 7
  %v1228 = vsub.s32 6, %v1227
  %v1229 = vrot.slane %v15, %v1228
  %v1230 = vlaneseq
  %v1231 = vshrl.u32 %v1230, 7
  %v1232 = vsub.s32 2, %v1231
  %v1233 = vrot.slane %v16, %v1232
  %v1234 = vlaneseq
  %v1235 = vshrl.u32 %v1234, 7
  %v1236 = vsub.s32 6, %v1235
  %v1237 = vrot.slane %v16, %v1236
  %v1238 = vlaneseq
  %v1239 = vshrl.u32 %v1238, 7
  %v1240 = vsub.s32 2, %v1239
  %v1241 = vrot.slane %v17, %v1240
  %v1242 = vlaneseq
  %v1243 = vshrl.u32 %v1242, 7
  %v1244 = vsub.s32 6, %v1243
  %v1245 = vrot.slane %v17, %v1244
  %v1246 = vlaneseq
  %v1247 = vshrl.u32 %v1246, 7
  %v1248 = vsub.s32 2, %v1247
  %v1249 = vrot.slane %v18, %v1248
  %v1250 = vlaneseq
  %v1251 = vshrl.u32 %v1250, 7
  %v1252 = vsub.s32 6, %v1251
  %v1253 = vrot.slane %v18, %v1252
  %v1254 = vlaneseq
  %v1255 = vshrl.u32 %v1254, 7
  %v1256 = vsub.s32 2, %v1255
  %v1257 = vrot.slane %v19, %v1256
  %v1258 = vlaneseq
  %v1259 = vshrl.u32 %v1258, 7
  %v1260 = vsub.s32 6, %v1259
  %v1261 = vrot.slane %v19, %v1260
  %v1262 = vlaneseq
  %v1263 = vshrl.u32 %v1262, 7
  %v1264 = vsub.s32 2, %v1263
  %v1265 = vrot.slane %v20, %v1264
  %v1266 = vlaneseq
  %v1267 = vshrl.u32 %v1266, 7
  %v1268 = vsub.s32 6, %v1267
  %v1269 = vrot.slane %v20, %v1268
  %v1270 = vlaneseq
  %v1271 = vshrl.u32 %v1270, 7
  %v1272 = vsub.s32 2, %v1271
  %v1273 = vrot.slane %v21, %v1272
  %v1274 = vlaneseq
  %v1275 = vshrl.u32 %v1274, 7
  %v1276 = vsub.s32 6, %v1275
  %v1277 = vrot.slane %v21, %v1276
  %v1278 = vlaneseq
  %v1279 = vshrl.u32 %v1278, 7
  %v1280 = vsub.s32 2, %v1279
  %v1281 = vrot.slane %v22, %v1280
  %v1282 = vlaneseq
  %v1283 = vshrl.u32 %v1282, 7
  %v1284 = vsub.s32 6, %v1283
  %v1285 = vrot.slane %v22, %v1284
  %v1286 = vlaneseq
  %v1287 = vshrl.u32 %v1286, 7
  %v1288 = vsub.s32 2, %v1287
  %v1289 = vrot.slane %v23, %v1288
  %v1290 = vlaneseq
  %v1291 = vshrl.u32 %v1290, 7
  %v1292 = vsub.s32 6, %v1291
  %v1293 = vrot.slane %v23, %v1292
  %v1294 = vlaneseq
  %v1295 = vshrl.u32 %v1294, 7
  %v1296 = vsub.s32 2, %v1295
  %v1297 = vrot.slane %v24, %v1296
  %v1298 = vlaneseq
  %v1299 = vshrl.u32 %v1298, 7
  %v1300 = vsub.s32 6, %v1299
  %v1301 = vrot.slane %v24, %v1300
  %v1302 = vlaneseq
  %v1303 = vshrl.u32 %v1302, 7
  %v1304 = vsub.s32 2, %v1303
  %v1305 = vrot.slane %v25, %v1304
  %v1306 = vlaneseq
  %v1307 = vshrl.u32 %v1306, 7
  %v1308 = vsub.s32 6, %v1307
  %v1309 = vrot.slane %v25, %v1308
  %v1310 = vlaneseq
  %v1311 = vshrl.u32 %v1310, 7
  %v1312 = vsub.s32 2, %v1311
  %v1313 = vrot.slane %v26, %v1312
  %v1314 = vlaneseq
  %v1315 = vshrl.u32 %v1314, 7
  %v1316 = vsub.s32 6, %v1315
  %v1317 = vrot.slane %v26, %v1316
  %v1318 = vlaneseq
  %v1319 = vshrl.u32 %v1318, 7
  %v1320 = vsub.s32 2, %v1319
  %v1321 = vrot.slane %v27, %v1320
  %v1322 = vlaneseq
  %v1323 = vshrl.u32 %v1322, 7
  %v1324 = vsub.s32 6, %v1323
  %v1325 = vrot.slane %v27, %v1324
  %v1326 = vlaneseq
  %v1327 = vshrl.u32 %v1326, 7
  %v1328 = vsub.s32 2, %v1327
  %v1329 = vrot.slane %v28, %v1328
  %v1330 = vlaneseq
  %v1331 = vshrl.u32 %v1330, 7
  %v1332 = vsub.s32 6, %v1331
  %v1333 = vrot.slane %v28, %v1332
  %v1334 = vlaneseq
  %v1335 = vshrl.u32 %v1334, 7
  %v1336 = vsub.s32 2, %v1335
  %v1337 = vrot.slane %v29, %v1336
  %v1338 = vlaneseq
  %v1339 = vshrl.u32 %v1338, 7
  %v1340 = vsub.s32 6, %v1339
  %v1341 = vrot.slane %v29, %v1340
  %v1374 = vlaneseq
  %v1375 = vshrl.u32 %v1374, 7
  %v1376 = vsub.s32 2, %v1375
  %v1377 = vrot.slane %v1217, %v1376
  %v1378 = vlaneseq
  %v1379 = vshrl.u32 %v1378, 7
  %v1380 = vsub.s32 2, %v1379
  %v1381 = vrot.slane %v1221, %v1380
  %v1382 = vlaneseq
  %v1383 = vshrl.u32 %v1382, 7
  %v1384 = vsub.s32 2, %v1383
  %v1385 = vrot.slane %v1225, %v1384
  %v1386 = vlaneseq
  %v1387 = vshrl.u32 %v1386, 7
  %v1388 = vsub.s32 2, %v1387
  %v1389 = vrot.slane %v1229, %v1388
  %v1390 = vlaneseq
  %v1391 = vshrl.u32 %v1390, 7
  %v1392 = vsub.s32 2, %v1391
  %v1393 = vrot.slane %v1233, %v1392
  %v1394 = vlaneseq
  %v1395 = vshrl.u32 %v1394, 7
  %v1396 = vsub.s32 2, %v1395
  %v1397 = vrot.slane %v1237, %v1396
  %v1398 = vlaneseq
  %v1399 = vshrl.u32 %v1398, 7
  %v1400 = vsub.s32 2, %v1399
  %v1401 = vrot.slane %v1241, %v1400
  %v1402 = vlaneseq
  %v1403 = vshrl.u32 %v1402, 7
  %v1404 = vsub.s32 2, %v1403
  %v1405 = vrot.slane %v1245, %v1404
  %v1406 = vlaneseq
  %v1407 = vshrl.u32 %v1406, 7
  %v1408 = vsub.s32 2, %v1407
  %v1409 = vrot.slane %v1249, %v1408
  %v1410 = vlaneseq
  %v1411 = vshrl.u32 %v1410, 7
  %v1412 = vsub.s32 2, %v1411
  %v1413 = vrot.slane %v1253, %v1412
  %v1414 = vlaneseq
  %v1415 = vshrl.u32 %v1414, 7
  %v1416 = vsub.s32 2, %v1415
  %v1417 = vrot.slane %v1257, %v1416
  %v1418 = vlaneseq
  %v1419 = vshrl.u32 %v1418, 7
  %v1420 = vsub.s32 2, %v1419
  %v1421 = vrot.slane %v1261, %v1420
  %v1422 = vlaneseq
  %v1423 = vshrl.u32 %v1422, 7
  %v1424 = vsub.s32 2, %v1423
  %v1425 = vrot.slane %v1265, %v1424
  %v1426 = vlaneseq
  %v1427 = vshrl.u32 %v1426, 7
  %v1428 = vsub.s32 2, %v1427
  %v1429 = vrot.slane %v1269, %v1428
  %v1430 = vlaneseq
  %v1431 = vshrl.u32 %v1430, 7
  %v1432 = vsub.s32 2, %v1431
  %v1433 = vrot.slane %v1273, %v1432
  %v1434 = vlaneseq
  %v1435 = vshrl.u32 %v1434, 7
  %v1436 = vsub.s32 2, %v1435
  %v1437 = vrot.slane %v1277, %v1436
  %v1438 = vlaneseq
  %v1439 = vshrl.u32 %v1438, 7
  %v1440 = vsub.s32 2, %v1439
  %v1441 = vrot.slane %v1281, %v1440
  %v1442 = vlaneseq
  %v1443 = vshrl.u32 %v1442, 7
  %v1444 = vsub.s32 2, %v1443
  %v1445 = vrot.slane %v1285, %v1444
  %v1446 = vlaneseq
  %v1447 = vshrl.u32 %v1446, 7
  %v1448 = vsub.s32 2, %v1447
  %v1449 = vrot.slane %v1289, %v1448
  %v1450 = vlaneseq
  %v1451 = vshrl.u32 %v1450, 7
  %v1452 = vsub.s32 2, %v1451
  %v1453 = vrot.slane %v1293, %v1452
  %v1454 = vlaneseq
  %v1455 = vshrl.u32 %v1454, 7
  %v1456 = vsub.s32 2, %v1455
  %v1457 = vrot.slane %v1297, %v1456
  %v1458 = vlaneseq
  %v1459 = vshrl.u32 %v1458, 7
  %v1460 = vsub.s32 2, %v1459
  %v1461 = vrot.slane %v1301, %v1460
  %v1462 = vlaneseq
  %v1463 = vshrl.u32 %v1462, 7
  %v1464 = vsub.s32 2, %v1463
  %v1465 = vrot.slane %v1305, %v1464
  %v1466 = vlaneseq
  %v1467 = vshrl.u32 %v1466, 7
  %v1468 = vsub.s32 2, %v1467
  %v1469 = vrot.slane %v1309, %v1468
  %v1470 = vlaneseq
  %v1471 = vshrl.u32 %v1470, 7
  %v1472 = vsub.s32 2, %v1471
  %v1473 = vrot.slane %v1313, %v1472
  %v1474 = vlaneseq
  %v1475 = vshrl.u32 %v1474, 7
  %v1476 = vsub.s32 2, %v1475
  %v1477 = vrot.slane %v1317, %v1476
  %v1478 = vlaneseq
  %v1479 = vshrl.u32 %v1478, 7
  %v1480 = vsub.s32 2, %v1479
  %v1481 = vrot.slane %v1321, %v1480
  %v1482 = vlaneseq
  %v1483 = vshrl.u32 %v1482, 7
  %v1484 = vsub.s32 2, %v1483
  %v1485 = vrot.slane %v1325, %v1484
  %v1486 = vlaneseq
  %v1487 = vshrl.u32 %v1486, 7
  %v1488 = vsub.s32 2, %v1487
  %v1489 = vrot.slane %v1329, %v1488
  %v1490 = vlaneseq
  %v1491 = vshrl.u32 %v1490, 7
  %v1492 = vsub.s32 2, %v1491
  %v1493 = vrot.slane %v1333, %v1492
  %v1494 = vlaneseq
  %v1495 = vshrl.u32 %v1494, 7
  %v1496 = vsub.s32 2, %v1495
  %v1497 = vrot.slane %v1337, %v1496
  %v1498 = vlaneseq
  %v1499 = vshrl.u32 %v1498, 7
  %v1500 = vsub.s32 2, %v1499
  %v1501 = vrot.slane %v1341, %v1500
  %v1502 = vmul.f32 %v1200, %v1377
  %v1503 = vmul.f32 %v1200, %v1381
  %v1504 = vmul.f32 %v1200, %v1385
  %v1505 = vmul.f32 %v1200, %v1389
  %v1506 = vmul.f32 %v1200, %v1393
  %v1507 = vmul.f32 %v1200, %v1397
  %v1508 = vmul.f32 %v1200, %v1401
  %v1509 = vmul.f32 %v1200, %v1405
  %v1510 = vmul.f32 %v1200, %v1409
  %v1511 = vmul.f32 %v1200, %v1413
  %v1512 = vmul.f32 %v1200, %v1417
  %v1513 = vmul.f32 %v1200, %v1421
  %v1514 = vmul.f32 %v1200, %v1425
  %v1515 = vmul.f32 %v1200, %v1429
  %v1516 = vmul.f32 %v1200, %v1433
  %v1517 = vmul.f32 %v1200, %v1437
  %v1518 = vmul.f32 %v1200, %v1441
  %v1519 = vmul.f32 %v1200, %v1445
  %v1520 = vmul.f32 %v1200, %v1449
  %v1521 = vmul.f32 %v1200, %v1453
  %v1522 = vmul.f32 %v1200, %v1457
  %v1523 = vmul.f32 %v1200, %v1461
  %v1524 = vmul.f32 %v1200, %v1465
  %v1525 = vmul.f32 %v1200, %v1469
  %v1526 = vmul.f32 %v1200, %v1473
  %v1527 = vmul.f32 %v1200, %v1477
  %v1528 = vmul.f32 %v1200, %v1481
  %v1529 = vmul.f32 %v1200, %v1485
  %v1530 = vmul.f32 %v1200, %v1489
  %v1531 = vmul.f32 %v1200, %v1493
  %v1532 = vmul.f32 %v1200, %v1497
  %v1533 = vmul.f32 %v1200, %v1501
  %v1534 = vmul.f32 %v1204, %v1377
  %v1535 = vmul.f32 %v1204, %v1381
  %v1536 = vmul.f32 %v1204, %v1385
  %v1537 = vmul.f32 %v1204, %v1389
  %v1538 = vmul.f32 %v1204, %v1393
  %v1539 = vmul.f32 %v1204, %v1397
  %v1540 = vmul.f32 %v1204, %v1401
  %v1541 = vmul.f32 %v1204, %v1405
  %v1542 = vmul.f32 %v1204, %v1409
  %v1543 = vmul.f32 %v1204, %v1413
  %v1544 = vmul.f32 %v1204, %v1417
  %v1545 = vmul.f32 %v1204, %v1421
  %v1546 = vmul.f32 %v1204, %v1425
  %v1547 = vmul.f32 %v1204, %v1429
  %v1548 = vmul.f32 %v1204, %v1433
  %v1549 = vmul.f32 %v1204, %v1437
  %v1550 = vmul.f32 %v1204, %v1441
  %v1551 = vmul.f32 %v1204, %v1445
  %v1552 = vmul.f32 %v1204, %v1449
  %v1553 = vmul.f32 %v1204, %v1453
  %v1554 = vmul.f32 %v1204, %v1457
  %v1555 = vmul.f32 %v1204, %v1461
  %v1556 = vmul.f32 %v1204, %v1465
  %v1557 = vmul.f32 %v1204, %v1469
  %v1558 = vmul.f32 %v1204, %v1473
  %v1559 = vmul.f32 %v1204, %v1477
  %v1560 = vmul.f32 %v1204, %v1481
  %v1561 = vmul.f32 %v1204, %v1485
  %v1562 = vmul.f32 %v1204, %v1489
  %v1563 = vmul.f32 %v1204, %v1493
  %v1564 = vmul.f32 %v1204, %v1497
  %v1565 = vmul.f32 %v1204, %v1501
  %v1566 = vmul.f32 %v1208, %v1377
  %v1567 = vmul.f32 %v1208, %v1381
  %v1568 = vmul.f32 %v1208, %v1385
  %v1569 = vmul.f32 %v1208, %v1389
  %v1570 = vmul.f32 %v1208, %v1393
  %v1571 = vmul.f32 %v1208, %v1397
  %v1572 = vmul.f32 %v1208, %v1401
  %v1573 = vmul.f32 %v1208, %v1405
  %v1574 = vmul.f32 %v1208, %v1409
  %v1575 = vmul.f32 %v1208, %v1413
  %v1576 = vmul.f32 %v1208, %v1417
  %v1577 = vmul.f32 %v1208, %v1421
  %v1578 = vmul.f32 %v1208, %v1425
  %v1579 = vmul.f32 %v1208, %v1429
  %v1580 = vmul.f32 %v1208, %v1433
  %v1581 = vmul.f32 %v1208, %v1437
  %v1582 = vmul.f32 %v1208, %v1441
  %v1583 = vmul.f32 %v1208, %v1445
  %v1584 = vmul.f32 %v1208, %v1449
  %v1585 = vmul.f32 %v1208, %v1453
  %v1586 = vmul.f32 %v1208, %v1457
  %v1587 = vmul.f32 %v1208, %v1461
  %v1588 = vmul.f32 %v1208, %v1465
  %v1589 = vmul.f32 %v1208, %v1469
  %v1590 = vmul.f32 %v1208, %v1473
  %v1591 = vmul.f32 %v1208, %v1477
  %v1592 = vmul.f32 %v1208, %v1481
  %v1593 = vmul.f32 %v1208, %v1485
  %v1594 = vmul.f32 %v1208, %v1489
  %v1595 = vmul.f32 %v1208, %v1493
  %v1596 = vmul.f32 %v1208, %v1497
  %v1597 = vmul.f32 %v1208, %v1501
  %v1598 = vmul.f32 %v1212, %v1377
  %v1599 = vmul.f32 %v1212, %v1381
  %v1600 = vmul.f32 %v1212, %v1385
  %v1601 = vmul.f32 %v1212, %v1389
  %v1602 = vmul.f32 %v1212, %v1393
  %v1603 = vmul.f32 %v1212, %v1397
  %v1604 = vmul.f32 %v1212, %v1401
  %v1605 = vmul.f32 %v1212, %v1405
  %v1606 = vmul.f32 %v1212, %v1409
  %v1607 = vmul.f32 %v1212, %v1413
  %v1608 = vmul.f32 %v1212, %v1417
  %v1609 = vmul.f32 %v1212, %v1421
  %v1610 = vmul.f32 %v1212, %v1425
  %v1611 = vmul.f32 %v1212, %v1429
  %v1612 = vmul.f32 %v1212, %v1433
  %v1613 = vmul.f32 %v1212, %v1437
  %v1614 = vmul.f32 %v1212, %v1441
  %v1615 = vmul.f32 %v1212, %v1445
  %v1616 = vmul.f32 %v1212, %v1449
  %v1617 = vmul.f32 %v1212, %v1453
  %v1618 = vmul.f32 %v1212, %v1457
  %v1619 = vmul.f32 %v1212, %v1461
  %v1620 = vmul.f32 %v1212, %v1465
  %v1621 = vmul.f32 %v1212, %v1469
  %v1622 = vmul.f32 %v1212, %v1473
  %v1623 = vmul.f32 %v1212, %v1477
  %v1624 = vmul.f32 %v1212, %v1481
  %v1625 = vmul.f32 %v1212, %v1485
  %v1626 = vmul.f32 %v1212, %v1489
  %v1627 = vmul.f32 %v1212, %v1493
  %v1628 = vmul.f32 %v1212, %v1497
  %v1629 = vmul.f32 %v1212, %v1501
  %v1630 = vadd.f32 %v1070, %v1502
  %v1631 = vadd.f32 %v1071, %v1503
  %v1632 = vadd.f32 %v1072, %v1504
  %v1633 = vadd.f32 %v1073, %v1505
  %v1634 = vadd.f32 %v1074, %v1506
  %v1635 = vadd.f32 %v1075, %v1507
  %v1636 = vadd.f32 %v1076, %v1508
  %v1637 = vadd.f32 %v1077, %v1509
  %v1638 = vadd.f32 %v1078, %v1510
  %v1639 = vadd.f32 %v1079, %v1511
  %v1640 = vadd.f32 %v1080, %v1512
  %v1641 = vadd.f32 %v1081, %v1513
  %v1642 = vadd.f32 %v1082, %v1514
  %v1643 = vadd.f32 %v1083, %v1515
  %v1644 = vadd.f32 %v1084, %v1516
  %v1645 = vadd.f32 %v1085, %v1517
  %v1646 = vadd.f32 %v1086, %v1518
  %v1647 = vadd.f32 %v1087, %v1519
  %v1648 = vadd.f32 %v1088, %v1520
  %v1649 = vadd.f32 %v1089, %v1521
  %v1650 = vadd.f32 %v1090, %v1522
  %v1651 = vadd.f32 %v1091, %v1523
  %v1652 = vadd.f32 %v1092, %v1524
  %v1653 = vadd.f32 %v1093, %v1525
  %v1654 = vadd.f32 %v1094, %v1526
  %v1655 = vadd.f32 %v1095, %v1527
  %v1656 = vadd.f32 %v1096, %v1528
  %v1657 = vadd.f32 %v1097, %v1529
  %v1658 = vadd.f32 %v1098, %v1530
  %v1659 = vadd.f32 %v1099, %v1531
  %v1660 = vadd.f32 %v1100, %v1532
  %v1661 = vadd.f32 %v1101, %v1533
  %v1662 = vadd.f32 %v1102, %v1534
  %v1663 = vadd.f32 %v1103, %v1535
  %v1664 = vadd.f32 %v1104, %v1536
  %v1665 = vadd.f32 %v1105, %v1537
  %v1666 = vadd.f32 %v1106, %v1538
  %v1667 = vadd.f32 %v1107, %v1539
  %v1668 = vadd.f32 %v1108, %v1540
  %v1669 = vadd.f32 %v1109, %v1541
  %v1670 = vadd.f32 %v1110, %v1542
  %v1671 = vadd.f32 %v1111, %v1543
  %v1672 = vadd.f32 %v1112, %v1544
  %v1673 = vadd.f32 %v1113, %v1545
  %v1674 = vadd.f32 %v1114, %v1546
  %v1675 = vadd.f32 %v1115, %v1547
  %v1676 = vadd.f32 %v1116, %v1548
  %v1677 = vadd.f32 %v1117, %v1549
  %v1678 = vadd.f32 %v1118, %v1550
  %v1679 = vadd.f32 %v1119, %v1551
  %v1680 = vadd.f32 %v1120, %v1552
  %v1681 = vadd.f32 %v1121, %v1553
  %v1682 = vadd.f32 %v1122, %v1554
  %v1683 = vadd.f32 %v1123, %v1555
  %v1684 = vadd.f32 %v1124, %v1556
  %v1685 = vadd.f32 %v1125, %v1557
  %v1686 = vadd.f32 %v1126, %v1558
  %v1687 = vadd.f32 %v1127, %v1559
  %v1688 = vadd.f32 %v1128, %v1560
  %v1689 = vadd.f32 %v1129, %v1561
  %v1690 = vadd.f32 %v1130, %v1562
  %v1691 = vadd.f32 %v1131, %v1563
  %v1692 = vadd.f32 %v1132, %v1564
  %v1693 = vadd.f32 %v1133, %v1565
  %v1694 = vadd.f32 %v1134, %v1566
  %v1695 = vadd.f32 %v1135, %v1567
  %v1696 = vadd.f32 %v1136, %v1568
  %v1697 = vadd.f32 %v1137, %v1569
  %v1698 = vadd.f32 %v1138, %v1570
  %v1699 = vadd.f32 %v1139, %v1571
  %v1700 = vadd.f32 %v1140, %v1572
  %v1701 = vadd.f32 %v1141, %v1573
  %v1702 = vadd.f32 %v1142, %v1574
  %v1703 = vadd.f32 %v1143, %v1575
  %v1704 = vadd.f32 %v1144, %v1576
  %v1705 = vadd.f32 %v1145, %v1577
  %v1706 = vadd.f32 %v1146, %v1578
  %v1707 = vadd.f32 %v1147, %v1579
  %v1708 = vadd.f32 %v1148, %v1580
  %v1709 = vadd.f32 %v1149, %v1581
  %v1710 = vadd.f32 %v1150, %v1582
  %v1711 = vadd.f32 %v1151, %v1583
  %v1712 = vadd.f32 %v1152, %v1584
  %v1713 = vadd.f32 %v1153, %v1585
  %v1714 = vadd.f32 %v1154, %v1586
  %v1715 = vadd.f32 %v1155, %v1587
  %v1716 = vadd.f32 %v1156, %v1588
  %v1717 = vadd.f32 %v1157, %v1589
  %v1718 = vadd.f32 %v1158, %v1590
  %v1719 = vadd.f32 %v1159, %v1591
  %v1720 = vadd.f32 %v1160, %v1592
  %v1721 = vadd.f32 %v1161, %v1593
  %v1722 = vadd.f32 %v1162, %v1594
  %v1723 = vadd.f32 %v1163, %v1595
  %v1724 = vadd.f32 %v1164, %v1596
  %v1725 = vadd.f32 %v1165, %v1597
  %v1726 = vadd.f32 %v1166, %v1598
  %v1727 = vadd.f32 %v1167, %v1599
  %v1728 = vadd.f32 %v1168, %v1600
  %v1729 = vadd.f32 %v1169, %v1601
  %v1730 = vadd.f32 %v1170, %v1602
  %v1731 = vadd.f32 %v1171, %v1603
  %v1732 = vadd.f32 %v1172, %v1604
  %v1733 = vadd.f32 %v1173, %v1605
  %v1734 = vadd.f32 %v1174, %v1606
  %v1735 = vadd.f32 %v1175, %v1607
  %v1736 = vadd.f32 %v1176, %v1608
  %v1737 = vadd.f32 %v1177, %v1609
  %v1738 = vadd.f32 %v1178, %v1610
  %v1739 = vadd.f32 %v1179, %v1611
  %v1740 = vadd.f32 %v1180, %v1612
  %v1741 = vadd.f32 %v1181, %v1613
  %v1742 = vadd.f32 %v1182, %v1614
  %v1743 = vadd.f32 %v1183, %v1615
  %v1744 = vadd.f32 %v1184, %v1616
  %v1745 = vadd.f32 %v1185, %v1617
  %v1746 = vadd.f32 %v1186, %v1618
  %v1747 = vadd.f32 %v1187, %v1619
  %v1748 = vadd.f32 %v1188, %v1620
  %v1749 = vadd.f32 %v1189, %v1621
  %v1750 = vadd.f32 %v1190, %v1622
  %v1751 = vadd.f32 %v1191, %v1623
  %v1752 = vadd.f32 %v1192, %v1624
  %v1753 = vadd.f32 %v1193, %v1625
  %v1754 = vadd.f32 %v1194, %v1626
  %v1755 = vadd.f32 %v1195, %v1627
  %v1756 = vadd.f32 %v1196, %v1628
  %v1757 = vadd.f32 %v1197, %v1629
  %1758 = vst [vmem:[%s3] sm:$0xff] %v1630
  %1759 = vst [vmem:[%s3 + $0x8] sm:$0xff] %v1631
  %1760 = vst [vmem:[%s3 + $0x10] sm:$0xff] %v1632
  %1761 = vst [vmem:[%s3 + $0x18] sm:$0xff] %v1633
  %1762 = vst [vmem:[%s3 + $0x20] sm:$0xff] %v1634
  %1763 = vst [vmem:[%s3 + $0x28] sm:$0xff] %v1635
  %1764 = vst [vmem:[%s3 + $0x30] sm:$0xff] %v1636
  %1765 = vst [vmem:[%s3 + $0x38] sm:$0xff] %v1637
  %1766 = vst [vmem:[%s3 + $0x40] sm:$0xff] %v1638
  %1767 = vst [vmem:[%s3 + $0x48] sm:$0xff] %v1639
  %1768 = vst [vmem:[%s3 + $0x50] sm:$0xff] %v1640
  %1769 = vst [vmem:[%s3 + $0x58] sm:$0xff] %v1641
  %1770 = vst [vmem:[%s3 + $0x60] sm:$0xff] %v1642
  %1771 = vst [vmem:[%s3 + $0x68] sm:$0xff] %v1643
  %1772 = vst [vmem:[%s3 + $0x70] sm:$0xff] %v1644
  %1773 = vst [vmem:[%s3 + $0x78] sm:$0xff] %v1645
  %1774 = vst [vmem:[%s3 + $0x80] sm:$0xff] %v1646
  %1775 = vst [vmem:[%s3 + $0x88] sm:$0xff] %v1647
  %1776 = vst [vmem:[%s3 + $0x90] sm:$0xff] %v1648
  %1777 = vst [vmem:[%s3 + $0x98] sm:$0xff] %v1649
  %1778 = vst [vmem:[%s3 + $0xa0] sm:$0xff] %v1650
  %1779 = vst [vmem:[%s3 + $0xa8] sm:$0xff] %v1651
  %1780 = vst [vmem:[%s3 + $0xb0] sm:$0xff] %v1652
  %1781 = vst [vmem:[%s3 + $0xb8] sm:$0xff] %v1653
  %1782 = vst [vmem:[%s3 + $0xc0] sm:$0xff] %v1654
  %1783 = vst [vmem:[%s3 + $0xc8] sm:$0xff] %v1655
  %1784 = vst [vmem:[%s3 + $0xd0] sm:$0xff] %v1656
  %1785 = vst [vmem:[%s3 + $0xd8] sm:$0xff] %v1657
  %1786 = vst [vmem:[%s3 + $0xe0] sm:$0xff] %v1658
  %1787 = vst [vmem:[%s3 + $0xe8] sm:$0xff] %v1659
  %1788 = vst [vmem:[%s3 + $0xf0] sm:$0xff] %v1660
  %1789 = vst [vmem:[%s3 + $0xf8] sm:$0xff] %v1661
  %1790 = vst [vmem:[%s3 + $0x100] sm:$0xff] %v1662
  %1791 = vst [vmem:[%s3 + $0x108] sm:$0xff] %v1663
  %1792 = vst [vmem:[%s3 + $0x110] sm:$0xff] %v1664
  %1793 = vst [vmem:[%s3 + $0x118] sm:$0xff] %v1665
  %1794 = vst [vmem:[%s3 + $0x120] sm:$0xff] %v1666
  %1795 = vst [vmem:[%s3 + $0x128] sm:$0xff] %v1667
  %1796 = vst [vmem:[%s3 + $0x130] sm:$0xff] %v1668
  %1797 = vst [vmem:[%s3 + $0x138] sm:$0xff] %v1669
  %1798 = vst [vmem:[%s3 + $0x140] sm:$0xff] %v1670
  %1799 = vst [vmem:[%s3 + $0x148] sm:$0xff] %v1671
  %1800 = vst [vmem:[%s3 + $0x150] sm:$0xff] %v1672
  %1801 = vst [vmem:[%s3 + $0x158] sm:$0xff] %v1673
  %1802 = vst [vmem:[%s3 + $0x160] sm:$0xff] %v1674
  %1803 = vst [vmem:[%s3 + $0x168] sm:$0xff] %v1675
  %1804 = vst [vmem:[%s3 + $0x170] sm:$0xff] %v1676
  %1805 = vst [vmem:[%s3 + $0x178] sm:$0xff] %v1677
  %1806 = vst [vmem:[%s3 + $0x180] sm:$0xff] %v1678
  %1807 = vst [vmem:[%s3 + $0x188] sm:$0xff] %v1679
  %1808 = vst [vmem:[%s3 + $0x190] sm:$0xff] %v1680
  %1809 = vst [vmem:[%s3 + $0x198] sm:$0xff] %v1681
  %1810 = vst [vmem:[%s3 + $0x1a0] sm:$0xff] %v1682
  %1811 = vst [vmem:[%s3 + $0x1a8] sm:$0xff] %v1683
  %1812 = vst [vmem:[%s3 + $0x1b0] sm:$0xff] %v1684
  %1813 = vst [vmem:[%s3 + $0x1b8] sm:$0xff] %v1685
  %1814 = vst [vmem:[%s3 + $0x1c0] sm:$0xff] %v1686
  %1815 = vst [vmem:[%s3 + $0x1c8] sm:$0xff] %v1687
  %1816 = vst [vmem:[%s3 + $0x1d0] sm:$0xff] %v1688
  %1817 = vst [vmem:[%s3 + $0x1d8] sm:$0xff] %v1689
  %1818 = vst [vmem:[%s3 + $0x1e0] sm:$0xff] %v1690
  %1819 = vst [vmem:[%s3 + $0x1e8] sm:$0xff] %v1691
  %1820 = vst [vmem:[%s3 + $0x1f0] sm:$0xff] %v1692
  %1821 = vst [vmem:[%s3 + $0x1f8] sm:$0xff] %v1693
  %1822 = vst [vmem:[%s3 + $0x200] sm:$0xff] %v1694
  %1823 = vst [vmem:[%s3 + $0x208] sm:$0xff] %v1695
  %1824 = vst [vmem:[%s3 + $0x210] sm:$0xff] %v1696
  %1825 = vst [vmem:[%s3 + $0x218] sm:$0xff] %v1697
  %1826 = vst [vmem:[%s3 + $0x220] sm:$0xff] %v1698
  %1827 = vst [vmem:[%s3 + $0x228] sm:$0xff] %v1699
  %1828 = vst [vmem:[%s3 + $0x230] sm:$0xff] %v1700
  %1829 = vst [vmem:[%s3 + $0x238] sm:$0xff] %v1701
  %1830 = vst [vmem:[%s3 + $0x240] sm:$0xff] %v1702
  %1831 = vst [vmem:[%s3 + $0x248] sm:$0xff] %v1703
  %1832 = vst [vmem:[%s3 + $0x250] sm:$0xff] %v1704
  %1833 = vst [vmem:[%s3 + $0x258] sm:$0xff] %v1705
  %1834 = vst [vmem:[%s3 + $0x260] sm:$0xff] %v1706
  %1835 = vst [vmem:[%s3 + $0x268] sm:$0xff] %v1707
  %1836 = vst [vmem:[%s3 + $0x270] sm:$0xff] %v1708
  %1837 = vst [vmem:[%s3 + $0x278] sm:$0xff] %v1709
  %1838 = vst [vmem:[%s3 + $0x280] sm:$0xff] %v1710
  %1839 = vst [vmem:[%s3 + $0x288] sm:$0xff] %v1711
  %1840 = vst [vmem:[%s3 + $0x290] sm:$0xff] %v1712
  %1841 = vst [vmem:[%s3 + $0x298] sm:$0xff] %v1713
  %1842 = vst [vmem:[%s3 + $0x2a0] sm:$0xff] %v1714
  %1843 = vst [vmem:[%s3 + $0x2a8] sm:$0xff] %v1715
  %1844 = vst [vmem:[%s3 + $0x2b0] sm:$0xff] %v1716
  %1845 = vst [vmem:[%s3 + $0x2b8] sm:$0xff] %v1717
  %1846 = vst [vmem:[%s3 + $0x2c0] sm:$0xff] %v1718
  %1847 = vst [vmem:[%s3 + $0x2c8] sm:$0xff] %v1719
  %1848 = vst [vmem:[%s3 + $0x2d0] sm:$0xff] %v1720
  %1849 = vst [vmem:[%s3 + $0x2d8] sm:$0xff] %v1721
  %1850 = vst [vmem:[%s3 + $0x2e0] sm:$0xff] %v1722
  %1851 = vst [vmem:[%s3 + $0x2e8] sm:$0xff] %v1723
  %1852 = vst [vmem:[%s3 + $0x2f0] sm:$0xff] %v1724
  %1853 = vst [vmem:[%s3 + $0x2f8] sm:$0xff] %v1725
  %1854 = vst [vmem:[%s3 + $0x300] sm:$0xff] %v1726
  %1855 = vst [vmem:[%s3 + $0x308] sm:$0xff] %v1727
  %1856 = vst [vmem:[%s3 + $0x310] sm:$0xff] %v1728
  %1857 = vst [vmem:[%s3 + $0x318] sm:$0xff] %v1729
  %1858 = vst [vmem:[%s3 + $0x320] sm:$0xff] %v1730
  %1859 = vst [vmem:[%s3 + $0x328] sm:$0xff] %v1731
  %1860 = vst [vmem:[%s3 + $0x330] sm:$0xff] %v1732
  %1861 = vst [vmem:[%s3 + $0x338] sm:$0xff] %v1733
  %1862 = vst [vmem:[%s3 + $0x340] sm:$0xff] %v1734
  %1863 = vst [vmem:[%s3 + $0x348] sm:$0xff] %v1735
  %1864 = vst [vmem:[%s3 + $0x350] sm:$0xff] %v1736
  %1865 = vst [vmem:[%s3 + $0x358] sm:$0xff] %v1737
  %1866 = vst [vmem:[%s3 + $0x360] sm:$0xff] %v1738
  %1867 = vst [vmem:[%s3 + $0x368] sm:$0xff] %v1739
  %1868 = vst [vmem:[%s3 + $0x370] sm:$0xff] %v1740
  %1869 = vst [vmem:[%s3 + $0x378] sm:$0xff] %v1741
  %1870 = vst [vmem:[%s3 + $0x380] sm:$0xff] %v1742
  %1871 = vst [vmem:[%s3 + $0x388] sm:$0xff] %v1743
  %1872 = vst [vmem:[%s3 + $0x390] sm:$0xff] %v1744
  %1873 = vst [vmem:[%s3 + $0x398] sm:$0xff] %v1745
  %1874 = vst [vmem:[%s3 + $0x3a0] sm:$0xff] %v1746
  %1875 = vst [vmem:[%s3 + $0x3a8] sm:$0xff] %v1747
  %1876 = vst [vmem:[%s3 + $0x3b0] sm:$0xff] %v1748
  %1877 = vst [vmem:[%s3 + $0x3b8] sm:$0xff] %v1749
  %1878 = vst [vmem:[%s3 + $0x3c0] sm:$0xff] %v1750
  %1879 = vst [vmem:[%s3 + $0x3c8] sm:$0xff] %v1751
  %1880 = vst [vmem:[%s3 + $0x3d0] sm:$0xff] %v1752
  %1881 = vst [vmem:[%s3 + $0x3d8] sm:$0xff] %v1753
  %1882 = vst [vmem:[%s3 + $0x3e0] sm:$0xff] %v1754
  %1883 = vst [vmem:[%s3 + $0x3e8] sm:$0xff] %v1755
  %1884 = vst [vmem:[%s3 + $0x3f0] sm:$0xff] %v1756
  %1885 = vst [vmem:[%s3 + $0x3f8] sm:$0xff] %v1757
  // Predicated region
  $region14: #{model_forward.1} parent=0 // pred_check
    _
  $region15: #{model_forward.1} parent=0 // pred_check_branch
    %1887 = sbr.rel (0) target = $region17
  $region16: #{model_forward.1} parent=0 // pred_region
    _
  $region17: #{model_forward.1} parent=0 // pred_fallthru
    _
  // Predicated region
  $region18: #{model_forward.1} parent=0 // pred_check
    _
  $region19: #{model_forward.1} parent=0 // pred_check_branch
    %1889 = sbr.rel (0) target = $region21
  $region20: #{model_forward.1} parent=0 // pred_region
    _
  $region21: #{model_forward.1} parent=0 // pred_fallthru
    _

</llo_original>
